<compile_context>
chip_gen: v6e
topology: v6e:2x2x1
jax: 0.10.0
libtpu: 0.0.40
codegen_flags: <defaults>
</compile_context>

<pallas_src>
import functools

import jax
import jax.numpy as jnp
from jax.experimental import pallas as pl
from jax.experimental.pallas import tpu as pltpu

EPS = 1e-5
_PW = 8  # left/right pad columns in the DW scratch -> sublane-aligned interior


# ---------------------------------------------------------------------------
# Fused Pallas kernel: one batch element per grid step, everything in VMEM.
# ---------------------------------------------------------------------------
def _shufflenet_unit_kernel(*refs, H, W, has_proj_shortcut):
    if has_proj_shortcut:
        (x_ref, w1_ref, s1_ref, b1_ref, w2_ref, s2_ref, b2_ref,
         w3_ref, s3_ref, b3_ref, wsc_ref, ssc_ref, bsc_ref,
         o_ref, pad_ref) = refs
    else:
        (x_ref, w1_ref, s1_ref, b1_ref, w2_ref, s2_ref, b2_ref,
         w3_ref, s3_ref, b3_ref, o_ref, pad_ref) = refs

    mid = w1_ref.shape[1]

    x = x_ref[0].astype(jnp.float32)              # (H, W, Cin)
    cin = x.shape[-1]
    x2d = x.reshape(H * W, cin)                   # cheap relayout (W % 8 == 0)

    # --- conv1 (grouped 1x1 as block-diagonal dense) + bn1 + ReLU ------------
    y = jnp.dot(x2d.astype(jnp.bfloat16), w1_ref[...],
                preferred_element_type=jnp.float32)        # (H*W, mid)
    y = jnp.maximum(y * s1_ref[...] + b1_ref[...], 0.0)

    # --- 3x3 depthwise conv (pad=1, stride=1) + bn2 --------------------------
    # Halo handled entirely in VMEM: zero the scratch, store the interior at a
    # sublane-aligned column offset, then read 9 shifted taps.
    pad_ref[...] = jnp.zeros_like(pad_ref)
    pad_ref[pl.ds(1, H), pl.ds(_PW, W), :] = y.reshape(H, W, mid)

    acc = jnp.zeros((H, W, mid), jnp.float32)
    for dy in range(3):
        for dx in range(3):
            tap = pad_ref[pl.ds(dy, H), pl.ds(_PW - 1 + dx, W), :]
            acc = acc + tap * w2_ref[dy * 3 + dx]
    z = acc * s2_ref[0] + b2_ref[0]                          # (H, W, mid)

    # --- conv3 (channel shuffle folded into w3 rows) + bn3 + ReLU ------------
    z2d = z.reshape(H * W, mid)
    out = jnp.dot(z2d.astype(jnp.bfloat16), w3_ref[...],
                  preferred_element_type=jnp.float32)        # (H*W, Cout)
    out = jnp.maximum(out * s3_ref[...] + b3_ref[...], 0.0)

    # --- shortcut + residual add ---------------------------------------------
    if has_proj_shortcut:
        sc = jnp.dot(x2d.astype(jnp.bfloat16), wsc_ref[...],
                     preferred_element_type=jnp.float32)
        sc = sc * ssc_ref[...] + bsc_ref[...]
    else:
        sc = x2d                                             # identity (in == out)
    out = out + sc

    o_ref[0] = out.reshape(H, W, -1).astype(o_ref.dtype)


# ---------------------------------------------------------------------------
# pallas_call wrapper
# ---------------------------------------------------------------------------
def shufflenet_unit(x_nchw, params):
    N, Cin, H, W = x_nchw.shape
    mid, Cout = params["mid"], params["out"]
    has_proj = params["wsc"] is not None

    # NCHW -> NHWC (channels on the lane axis).
    # TODO(synk): for an all-NHWC model these wrapper transposes disappear.
    x = jnp.transpose(x_nchw, (0, 2, 3, 1))

    kernel = functools.partial(_shufflenet_unit_kernel, H=H, W=W,
                               has_proj_shortcut=has_proj)

    def _full(shape):
        return pl.BlockSpec(shape, lambda n, _s=shape: (0,) * len(_s))

    in_specs = [
        pl.BlockSpec((1, H, W, Cin), lambda n: (n, 0, 0, 0)),
        _full((Cin, mid)), _full((1, mid)), _full((1, mid)),      # conv1 / bn1
        _full((9, mid)), _full((1, mid)), _full((1, mid)),        # dw    / bn2
        _full((mid, Cout)), _full((1, Cout)), _full((1, Cout)),   # conv3 / bn3
    ]
    args = [x,
            params["w1"], params["s1"], params["b1"],
            params["w2"], params["s2"], params["b2"],
            params["w3"], params["s3"], params["b3"]]
    if has_proj:
        in_specs += [_full((Cin, Cout)), _full((1, Cout)), _full((1, Cout))]
        args += [params["wsc"], params["ssc"], params["bsc"]]

    out = pl.pallas_call(
        kernel,
        out_shape=jax.ShapeDtypeStruct((N, H, W, Cout), x.dtype),
        grid=(N,),
        in_specs=in_specs,
        out_specs=pl.BlockSpec((1, H, W, Cout), lambda n: (n, 0, 0, 0)),
        scratch_shapes=[pltpu.VMEM((H + 2, W + 2 * _PW, mid), jnp.float32)],
        compiler_params=pltpu.CompilerParams(
            dimension_semantics=("parallel",)),
    )(*args)

    return jnp.transpose(out, (0, 3, 1, 2))        # NHWC -> NCHW


# ---------------------------------------------------------------------------
# Parameter setup (glue, plain JAX, done once)
# ---------------------------------------------------------------------------
def grouped_1x1_to_dense(w, groups):
    """w: (Cout, Cin_per_group) grouped 1x1 conv -> block-diagonal (Cin, Cout).

    TODO(synk): for real ShuffleNet widths (C>=240) use per-group matmul tiles
    instead of the block-diagonal dense weight (2/3 of the MACs here are zeros).
    """
    Cout, Cin_g = w.shape
    Cout_g = Cout // groups
    Cin = Cin_g * groups
    W = jnp.zeros((Cin, Cout), w.dtype)
    for g in range(groups):
        W = W.at[g * Cin_g:(g + 1) * Cin_g,
                 g * Cout_g:(g + 1) * Cout_g].set(
                     w[g * Cout_g:(g + 1) * Cout_g].T)
    return W


def fold_bn(gamma, beta, running_mean, running_var):
    scale = gamma / jnp.sqrt(running_var + EPS)
    shift = beta - running_mean * scale
    return scale, shift


def init_params(key, in_channels, out_channels, groups=3):
    assert out_channels % 4 == 0
    mid = out_channels // 4
    assert in_channels % groups == 0 and mid % groups == 0
    ks = jax.random.split(key, 8)

    w1 = 0.1 * jax.random.normal(ks[0], (mid, in_channels // groups), jnp.float32)
    w2 = 0.1 * jax.random.normal(ks[1], (3, 3, mid), jnp.float32)
    w3 = 0.1 * jax.random.normal(ks[2], (out_channels, mid // groups), jnp.float32)

    def bn(k, c):
        gamma = 1.0 + 0.05 * jax.random.normal(k, (c,), jnp.float32)
        beta = 0.01 * jnp.arange(c, dtype=jnp.float32)
        # Running statistics (inference semantics): mean=0, var=1.
        return fold_bn(gamma, beta, jnp.zeros((c,), jnp.float32),
                       jnp.ones((c,), jnp.float32))

    s1, b1 = bn(ks[3], mid)
    s2, b2 = bn(ks[4], mid)
    s3, b3 = bn(ks[5], out_channels)

    w1_dense = grouped_1x1_to_dense(w1, groups)            # (Cin, mid)
    w3_dense = grouped_1x1_to_dense(w3, groups)            # (mid, Cout)

    # Fold the channel shuffle into conv3's weight rows.
    cpg = mid // groups
    perm = jnp.arange(mid).reshape(groups, cpg).T.reshape(-1)   # shuffled[j]=y[perm[j]]
    w3_folded = w3_dense[jnp.argsort(perm)]                     # y @ w3_folded == y[...,perm] @ w3_dense

    params = {
        "mid": mid, "out": out_channels, "groups": groups,
        # kernel-side tensors: matmul weights in bf16 (MXU-native, half DMA bytes)
        "w1": w1_dense.astype(jnp.bfloat16),
        "w2": w2.reshape(9, mid),                       # depthwise taps, f32 (VPU)
        "w3": w3_folded.astype(jnp.bfloat16),
        "s1": s1.reshape(1, mid), "b1": b1.reshape(1, mid),
        "s2": s2.reshape(1, mid), "b2": b2.reshape(1, mid),
        "s3": s3.reshape(1, out_channels), "b3": b3.reshape(1, out_channels),
        "wsc": None, "ssc": None, "bsc": None,
        # f32 / unfolded masters for the pure-JAX reference check
        "ref": {"w1": w1_dense, "w2": w2, "w3": w3_dense, "perm": perm,
                "wsc": None, "ssc": None, "bsc": None},
    }
    if in_channels != out_channels:
        wsc = 0.1 * jax.random.normal(ks[6], (out_channels, in_channels), jnp.float32)
        ssc, bsc = bn(ks[7], out_channels)
        params["wsc"] = wsc.T.astype(jnp.bfloat16)      # ungrouped 1x1 -> (Cin, Cout)
        params["ssc"] = ssc.reshape(1, out_channels)
        params["bsc"] = bsc.reshape(1, out_channels)
        params["ref"]["wsc"] = wsc.T
        params["ref"]["ssc"] = params["ssc"]
        params["ref"]["bsc"] = params["bsc"]
    return params


# ---------------------------------------------------------------------------
# Pure-JAX f32 reference (original, unfused semantics) for a sanity check
# ---------------------------------------------------------------------------
def shufflenet_unit_ref(x_nchw, params):
    mid, Cout = params["mid"], params["out"]
    r = params["ref"]
    N, Cin, H, W = x_nchw.shape
    x = jnp.transpose(x_nchw, (0, 2, 3, 1)).astype(jnp.float32)
    x2d = x.reshape(N * H * W, Cin)

    y = jnp.maximum(x2d @ r["w1"] * params["s1"] + params["b1"], 0.0)
    y = y.reshape(N, H, W, mid)

    yp = jnp.pad(y, ((0, 0), (1, 1), (1, 1), (0, 0)))
    acc = jnp.zeros((N, H, W, mid), jnp.float32)
    for dy in range(3):
        for dx in range(3):
            acc = acc + yp[:, dy:dy + H, dx:dx + W, :] * r["w2"][dy, dx]
    z = acc * params["s2"] + params["b2"]

    z = z[..., r["perm"]]                                   # channel shuffle
    out = jnp.maximum(z.reshape(-1, mid) @ r["w3"] * params["s3"] + params["b3"], 0.0)

    if r["wsc"] is not None:
        sc = x2d @ r["wsc"] * r["ssc"] + r["bsc"]
    else:
        sc = x2d
    out = out + sc
    return jnp.transpose(out.reshape(N, H, W, Cout), (0, 3, 1, 2))


# ---------------------------------------------------------------------------
if __name__ == "__main__":
    key = jax.random.PRNGKey(0)
    kx, kp = jax.random.split(key)

    # Small, module-consistent shapes: batch=2, in=out=24 channels (divisible
    # by 4 and by groups=3), 16x16 spatial -> identity shortcut path.
    N, Cin, Cout, H, W, groups = 2, 24, 24, 16, 16, 3
    x = jax.random.normal(kx, (N, Cin, H, W), jnp.float32)
    params = init_params(kp, Cin, Cout, groups)

    out = jax.block_until_ready(shufflenet_unit(x, params))
    assert out.shape == (N, Cout, H, W), out.shape
    assert bool(jnp.all(jnp.isfinite(out)))

    # Numerical sanity check vs. the unfused f32 reference (bf16 MXU inputs
    # introduce only small rounding error).
    ref = shufflenet_unit_ref(x, params)
    max_err = float(jnp.max(jnp.abs(out - ref)))
    assert max_err < 5e-2, f"max abs error vs reference: {max_err}"

    print("KERNEL_OK")
</pallas_src>

<mosaic_0001>
module attributes {stable_mosaic.version = 11 : i64} {
  func.func @_shufflenet_unit_kernel(%arg0: i32, %arg1: memref<1x16x16x24xf32, #tpu.memory_space<vmem>>, %arg2: memref<24x6xbf16, #tpu.memory_space<vmem>>, %arg3: memref<1x6xf32, #tpu.memory_space<vmem>>, %arg4: memref<1x6xf32, #tpu.memory_space<vmem>>, %arg5: memref<9x6xf32, #tpu.memory_space<vmem>>, %arg6: memref<1x6xf32, #tpu.memory_space<vmem>>, %arg7: memref<1x6xf32, #tpu.memory_space<vmem>>, %arg8: memref<6x24xbf16, #tpu.memory_space<vmem>>, %arg9: memref<1x24xf32, #tpu.memory_space<vmem>>, %arg10: memref<1x24xf32, #tpu.memory_space<vmem>>, %arg11: memref<1x16x16x24xf32, #tpu.memory_space<vmem>>, %arg12: memref<18x32x6xf32, #tpu.memory_space<vmem>>) attributes {dimension_semantics = [#tpu.dimension_semantics<parallel>], iteration_bounds = array<i64: 2>, scalar_prefetch = 0 : i64, scratch_operands = 1 : i64, tpu.core_type = #tpu.core_type<tc>, window_params = [{transform_indices = @transform_0, window_bounds = array<i64: 1, 16, 16, 24>}, {pipeline_mode = #tpu.pipeline_mode<synchronous>, transform_indices = @transform_1, window_bounds = array<i64: 24, 6>}, {pipeline_mode = #tpu.pipeline_mode<synchronous>, transform_indices = @transform_2, window_bounds = array<i64: 1, 6>}, {pipeline_mode = #tpu.pipeline_mode<synchronous>, transform_indices = @transform_3, window_bounds = array<i64: 1, 6>}, {pipeline_mode = #tpu.pipeline_mode<synchronous>, transform_indices = @transform_4, window_bounds = array<i64: 9, 6>}, {pipeline_mode = #tpu.pipeline_mode<synchronous>, transform_indices = @transform_5, window_bounds = array<i64: 1, 6>}, {pipeline_mode = #tpu.pipeline_mode<synchronous>, transform_indices = @transform_6, window_bounds = array<i64: 1, 6>}, {pipeline_mode = #tpu.pipeline_mode<synchronous>, transform_indices = @transform_7, window_bounds = array<i64: 6, 24>}, {pipeline_mode = #tpu.pipeline_mode<synchronous>, transform_indices = @transform_8, window_bounds = array<i64: 1, 24>}, {pipeline_mode = #tpu.pipeline_mode<synchronous>, transform_indices = @transform_9, window_bounds = array<i64: 1, 24>}, {transform_indices = @transform_10, window_bounds = array<i64: 1, 16, 16, 24>}]} {
    %c0 = arith.constant 0 : index
    %c0_0 = arith.constant 0 : index
    %c0_1 = arith.constant 0 : index
    %c0_2 = arith.constant 0 : index
    %0 = vector.load %arg1[%c0, %c0_0, %c0_1, %c0_2] : memref<1x16x16x24xf32, #tpu.memory_space<vmem>>, vector<1x16x16x24xf32>
    %1 = vector.shape_cast %0 : vector<1x16x16x24xf32> to vector<16x16x24xf32>
    %2 = vector.shape_cast %1 : vector<16x16x24xf32> to vector<256x24xf32>
    %3 = arith.truncf %2 : vector<256x24xf32> to vector<256x24xbf16>
    %c0_3 = arith.constant 0 : index
    %c0_4 = arith.constant 0 : index
    %4 = vector.load %arg2[%c0_3, %c0_4] : memref<24x6xbf16, #tpu.memory_space<vmem>>, vector<24x6xbf16>
    %cst = arith.constant dense<0.000000e+00> : vector<256x6xf32>
    %5 = tpu.matmul %3, %4, %cst {dimension_numbers = #tpu.dot_dimension_numbers<[1], [0], [0], [1], [0, 0, 1, 1], [], []>} : vector<256x24xbf16>, vector<24x6xbf16>, vector<256x6xf32> -> vector<256x6xf32>
    %c0_5 = arith.constant 0 : index
    %c0_6 = arith.constant 0 : index
    %6 = vector.load %arg3[%c0_5, %c0_6] : memref<1x6xf32, #tpu.memory_space<vmem>>, vector<1x6xf32>
    %7 = vector.broadcast %6 : vector<1x6xf32> to vector<256x6xf32>
    %8 = arith.mulf %5, %7 : vector<256x6xf32>
    %c0_7 = arith.constant 0 : index
    %c0_8 = arith.constant 0 : index
    %9 = vector.load %arg4[%c0_7, %c0_8] : memref<1x6xf32, #tpu.memory_space<vmem>>, vector<1x6xf32>
    %10 = vector.broadcast %9 : vector<1x6xf32> to vector<256x6xf32>
    %11 = arith.addf %8, %10 : vector<256x6xf32>
    %cst_9 = arith.constant 0.000000e+00 : f32
    %12 = vector.broadcast %cst_9 : f32 to vector<256x6xf32>
    %13 = arith.maximumf %11, %12 : vector<256x6xf32>
    %cst_10 = arith.constant 0.000000e+00 : f32
    %14 = vector.broadcast %cst_10 : f32 to vector<18x32x6xf32>
    %c0_11 = arith.constant 0 : index
    %c0_12 = arith.constant 0 : index
    %c0_13 = arith.constant 0 : index
    %15 = vector.load %arg12[%c0_11, %c0_12, %c0_13] : memref<18x32x6xf32, #tpu.memory_space<vmem>>, vector<18x32x6xf32>
    tpu.vector_store %arg12[%c0_11, %c0_12, %c0_13], %14 {strides = array<i32>} : memref<18x32x6xf32, #tpu.memory_space<vmem>>, vector<18x32x6xf32>,
    %16 = vector.shape_cast %13 : vector<256x6xf32> to vector<16x16x6xf32>
    %c1 = arith.constant 1 : index
    %c8 = arith.constant 8 : index
    %c0_14 = arith.constant 0 : index
    %17 = vector.load %arg12[%c1, %c8, %c0_14] : memref<18x32x6xf32, #tpu.memory_space<vmem>>, vector<16x16x6xf32>
    tpu.vector_store %arg12[%c1, %c8, %c0_14], %16 {strides = array<i32>} : memref<18x32x6xf32, #tpu.memory_space<vmem>>, vector<16x16x6xf32>,
    %cst_15 = arith.constant 0.000000e+00 : f32
    %18 = vector.broadcast %cst_15 : f32 to vector<16x16x6xf32>
    %c0_16 = arith.constant 0 : index
    %c7 = arith.constant 7 : index
    %c0_17 = arith.constant 0 : index
    %19 = vector.load %arg12[%c0_16, %c7, %c0_17] : memref<18x32x6xf32, #tpu.memory_space<vmem>>, vector<16x16x6xf32>
    %c0_18 = arith.constant 0 : index
    %c0_19 = arith.constant 0 : index
    %20 = vector.load %arg5[%c0_18, %c0_19] : memref<9x6xf32, #tpu.memory_space<vmem>>, vector<1x6xf32>
    %21 = vector.shape_cast %20 : vector<1x6xf32> to vector<6xf32>
    %22 = vector.shape_cast %21 : vector<6xf32> to vector<1x1x6xf32>
    %23 = vector.broadcast %22 : vector<1x1x6xf32> to vector<16x16x6xf32>
    %24 = arith.mulf %19, %23 : vector<16x16x6xf32>
    %25 = arith.addf %18, %24 : vector<16x16x6xf32>
    %c0_20 = arith.constant 0 : index
    %c8_21 = arith.constant 8 : index
    %c0_22 = arith.constant 0 : index
    %26 = vector.load %arg12[%c0_20, %c8_21, %c0_22] : memref<18x32x6xf32, #tpu.memory_space<vmem>>, vector<16x16x6xf32>
    %c1_23 = arith.constant 1 : index
    %c0_24 = arith.constant 0 : index
    %27 = vector.load %arg5[%c1_23, %c0_24] : memref<9x6xf32, #tpu.memory_space<vmem>>, vector<1x6xf32>
    %28 = vector.shape_cast %27 : vector<1x6xf32> to vector<6xf32>
    %29 = vector.shape_cast %28 : vector<6xf32> to vector<1x1x6xf32>
    %30 = vector.broadcast %29 : vector<1x1x6xf32> to vector<16x16x6xf32>
    %31 = arith.mulf %26, %30 : vector<16x16x6xf32>
    %32 = arith.addf %25, %31 : vector<16x16x6xf32>
    %c0_25 = arith.constant 0 : index
    %c9 = arith.constant 9 : index
    %c0_26 = arith.constant 0 : index
    %33 = vector.load %arg12[%c0_25, %c9, %c0_26] : memref<18x32x6xf32, #tpu.memory_space<vmem>>, vector<16x16x6xf32>
    %c2 = arith.constant 2 : index
    %c0_27 = arith.constant 0 : index
    %34 = vector.load %arg5[%c2, %c0_27] : memref<9x6xf32, #tpu.memory_space<vmem>>, vector<1x6xf32>
    %35 = vector.shape_cast %34 : vector<1x6xf32> to vector<6xf32>
    %36 = vector.shape_cast %35 : vector<6xf32> to vector<1x1x6xf32>
    %37 = vector.broadcast %36 : vector<1x1x6xf32> to vector<16x16x6xf32>
    %38 = arith.mulf %33, %37 : vector<16x16x6xf32>
    %39 = arith.addf %32, %38 : vector<16x16x6xf32>
    %c1_28 = arith.constant 1 : index
    %c7_29 = arith.constant 7 : index
    %c0_30 = arith.constant 0 : index
    %40 = vector.load %arg12[%c1_28, %c7_29, %c0_30] : memref<18x32x6xf32, #tpu.memory_space<vmem>>, vector<16x16x6xf32>
    %c3 = arith.constant 3 : index
    %c0_31 = arith.constant 0 : index
    %41 = vector.load %arg5[%c3, %c0_31] : memref<9x6xf32, #tpu.memory_space<vmem>>, vector<1x6xf32>
    %42 = vector.shape_cast %41 : vector<1x6xf32> to vector<6xf32>
    %43 = vector.shape_cast %42 : vector<6xf32> to vector<1x1x6xf32>
    %44 = vector.broadcast %43 : vector<1x1x6xf32> to vector<16x16x6xf32>
    %45 = arith.mulf %40, %44 : vector<16x16x6xf32>
    %46 = arith.addf %39, %45 : vector<16x16x6xf32>
    %c1_32 = arith.constant 1 : index
    %c8_33 = arith.constant 8 : index
    %c0_34 = arith.constant 0 : index
    %47 = vector.load %arg12[%c1_32, %c8_33, %c0_34] : memref<18x32x6xf32, #tpu.memory_space<vmem>>, vector<16x16x6xf32>
    %c4 = arith.constant 4 : index
    %c0_35 = arith.constant 0 : index
    %48 = vector.load %arg5[%c4, %c0_35] : memref<9x6xf32, #tpu.memory_space<vmem>>, vector<1x6xf32>
    %49 = vector.shape_cast %48 : vector<1x6xf32> to vector<6xf32>
    %50 = vector.shape_cast %49 : vector<6xf32> to vector<1x1x6xf32>
    %51 = vector.broadcast %50 : vector<1x1x6xf32> to vector<16x16x6xf32>
    %52 = arith.mulf %47, %51 : vector<16x16x6xf32>
    %53 = arith.addf %46, %52 : vector<16x16x6xf32>
    %c1_36 = arith.constant 1 : index
    %c9_37 = arith.constant 9 : index
    %c0_38 = arith.constant 0 : index
    %54 = vector.load %arg12[%c1_36, %c9_37, %c0_38] : memref<18x32x6xf32, #tpu.memory_space<vmem>>, vector<16x16x6xf32>
    %c5 = arith.constant 5 : index
    %c0_39 = arith.constant 0 : index
    %55 = vector.load %arg5[%c5, %c0_39] : memref<9x6xf32, #tpu.memory_space<vmem>>, vector<1x6xf32>
    %56 = vector.shape_cast %55 : vector<1x6xf32> to vector<6xf32>
    %57 = vector.shape_cast %56 : vector<6xf32> to vector<1x1x6xf32>
    %58 = vector.broadcast %57 : vector<1x1x6xf32> to vector<16x16x6xf32>
    %59 = arith.mulf %54, %58 : vector<16x16x6xf32>
    %60 = arith.addf %53, %59 : vector<16x16x6xf32>
    %c2_40 = arith.constant 2 : index
    %c7_41 = arith.constant 7 : index
    %c0_42 = arith.constant 0 : index
    %61 = vector.load %arg12[%c2_40, %c7_41, %c0_42] : memref<18x32x6xf32, #tpu.memory_space<vmem>>, vector<16x16x6xf32>
    %c6 = arith.constant 6 : index
    %c0_43 = arith.constant 0 : index
    %62 = vector.load %arg5[%c6, %c0_43] : memref<9x6xf32, #tpu.memory_space<vmem>>, vector<1x6xf32>
    %63 = vector.shape_cast %62 : vector<1x6xf32> to vector<6xf32>
    %64 = vector.shape_cast %63 : vector<6xf32> to vector<1x1x6xf32>
    %65 = vector.broadcast %64 : vector<1x1x6xf32> to vector<16x16x6xf32>
    %66 = arith.mulf %61, %65 : vector<16x16x6xf32>
    %67 = arith.addf %60, %66 : vector<16x16x6xf32>
    %c2_44 = arith.constant 2 : index
    %c8_45 = arith.constant 8 : index
    %c0_46 = arith.constant 0 : index
    %68 = vector.load %arg12[%c2_44, %c8_45, %c0_46] : memref<18x32x6xf32, #tpu.memory_space<vmem>>, vector<16x16x6xf32>
    %c7_47 = arith.constant 7 : index
    %c0_48 = arith.constant 0 : index
    %69 = vector.load %arg5[%c7_47, %c0_48] : memref<9x6xf32, #tpu.memory_space<vmem>>, vector<1x6xf32>
    %70 = vector.shape_cast %69 : vector<1x6xf32> to vector<6xf32>
    %71 = vector.shape_cast %70 : vector<6xf32> to vector<1x1x6xf32>
    %72 = vector.broadcast %71 : vector<1x1x6xf32> to vector<16x16x6xf32>
    %73 = arith.mulf %68, %72 : vector<16x16x6xf32>
    %74 = arith.addf %67, %73 : vector<16x16x6xf32>
    %c2_49 = arith.constant 2 : index
    %c9_50 = arith.constant 9 : index
    %c0_51 = arith.constant 0 : index
    %75 = vector.load %arg12[%c2_49, %c9_50, %c0_51] : memref<18x32x6xf32, #tpu.memory_space<vmem>>, vector<16x16x6xf32>
    %c8_52 = arith.constant 8 : index
    %c0_53 = arith.constant 0 : index
    %76 = vector.load %arg5[%c8_52, %c0_53] : memref<9x6xf32, #tpu.memory_space<vmem>>, vector<1x6xf32>
    %77 = vector.shape_cast %76 : vector<1x6xf32> to vector<6xf32>
    %78 = vector.shape_cast %77 : vector<6xf32> to vector<1x1x6xf32>
    %79 = vector.broadcast %78 : vector<1x1x6xf32> to vector<16x16x6xf32>
    %80 = arith.mulf %75, %79 : vector<16x16x6xf32>
    %81 = arith.addf %74, %80 : vector<16x16x6xf32>
    %c0_54 = arith.constant 0 : index
    %c0_55 = arith.constant 0 : index
    %82 = vector.load %arg6[%c0_54, %c0_55] : memref<1x6xf32, #tpu.memory_space<vmem>>, vector<1x6xf32>
    %83 = vector.shape_cast %82 : vector<1x6xf32> to vector<6xf32>
    %84 = vector.shape_cast %83 : vector<6xf32> to vector<1x1x6xf32>
    %85 = vector.broadcast %84 : vector<1x1x6xf32> to vector<16x16x6xf32>
    %86 = arith.mulf %81, %85 : vector<16x16x6xf32>
    %c0_56 = arith.constant 0 : index
    %c0_57 = arith.constant 0 : index
    %87 = vector.load %arg7[%c0_56, %c0_57] : memref<1x6xf32, #tpu.memory_space<vmem>>, vector<1x6xf32>
    %88 = vector.shape_cast %87 : vector<1x6xf32> to vector<6xf32>
    %89 = vector.shape_cast %88 : vector<6xf32> to vector<1x1x6xf32>
    %90 = vector.broadcast %89 : vector<1x1x6xf32> to vector<16x16x6xf32>
    %91 = arith.addf %86, %90 : vector<16x16x6xf32>
    %92 = vector.shape_cast %91 : vector<16x16x6xf32> to vector<256x6xf32>
    %93 = arith.truncf %92 : vector<256x6xf32> to vector<256x6xbf16>
    %c0_58 = arith.constant 0 : index
    %c0_59 = arith.constant 0 : index
    %94 = vector.load %arg8[%c0_58, %c0_59] : memref<6x24xbf16, #tpu.memory_space<vmem>>, vector<6x24xbf16>
    %cst_60 = arith.constant dense<0.000000e+00> : vector<256x24xf32>
    %95 = tpu.matmul %93, %94, %cst_60 {dimension_numbers = #tpu.dot_dimension_numbers<[1], [0], [0], [1], [0, 0, 1, 1], [], []>} : vector<256x6xbf16>, vector<6x24xbf16>, vector<256x24xf32> -> vector<256x24xf32>
    %c0_61 = arith.constant 0 : index
    %c0_62 = arith.constant 0 : index
    %96 = vector.load %arg9[%c0_61, %c0_62] : memref<1x24xf32, #tpu.memory_space<vmem>>, vector<1x24xf32>
    %97 = vector.broadcast %96 : vector<1x24xf32> to vector<256x24xf32>
    %98 = arith.mulf %95, %97 : vector<256x24xf32>
    %c0_63 = arith.constant 0 : index
    %c0_64 = arith.constant 0 : index
    %99 = vector.load %arg10[%c0_63, %c0_64] : memref<1x24xf32, #tpu.memory_space<vmem>>, vector<1x24xf32>
    %100 = vector.broadcast %99 : vector<1x24xf32> to vector<256x24xf32>
    %101 = arith.addf %98, %100 : vector<256x24xf32>
    %cst_65 = arith.constant 0.000000e+00 : f32
    %102 = vector.broadcast %cst_65 : f32 to vector<256x24xf32>
    %103 = arith.maximumf %101, %102 : vector<256x24xf32>
    %104 = arith.addf %103, %2 : vector<256x24xf32>
    %105 = vector.shape_cast %104 : vector<256x24xf32> to vector<16x16x24xf32>
    %c0_66 = arith.constant 0 : index
    %c0_67 = arith.constant 0 : index
    %c0_68 = arith.constant 0 : index
    %c0_69 = arith.constant 0 : index
    %106 = vector.load %arg11[%c0_66, %c0_67, %c0_68, %c0_69] : memref<1x16x16x24xf32, #tpu.memory_space<vmem>>, vector<1x16x16x24xf32>
    %107 = vector.shape_cast %106 : vector<1x16x16x24xf32> to vector<16x16x24xf32>
    %108 = vector.shape_cast %105 : vector<16x16x24xf32> to vector<1x16x16x24xf32>
    tpu.vector_store %arg11[%c0_66, %c0_67, %c0_68, %c0_69], %108 {strides = array<i32>} : memref<1x16x16x24xf32, #tpu.memory_space<vmem>>, vector<1x16x16x24xf32>,
    return
  }
  func.func @transform_0(%arg0: i32) -> (i32, i32, i32, i32) {
    %c0_i32 = arith.constant 0 : i32
    %c0_i32_0 = arith.constant 0 : i32
    %c0_i32_1 = arith.constant 0 : i32
    %c0_i32_2 = arith.constant 0 : i32
    return %arg0, %c0_i32, %c0_i32_0, %c0_i32_1 : i32, i32, i32, i32
  }
  func.func @transform_1(%arg0: i32) -> (i32, i32) {
    %c0_i32 = arith.constant 0 : i32
    %c0_i32_0 = arith.constant 0 : i32
    %c0_i32_1 = arith.constant 0 : i32
    return %c0_i32, %c0_i32_0 : i32, i32
  }
  func.func @transform_2(%arg0: i32) -> (i32, i32) {
    %c0_i32 = arith.constant 0 : i32
    %c0_i32_0 = arith.constant 0 : i32
    %c0_i32_1 = arith.constant 0 : i32
    return %c0_i32, %c0_i32_0 : i32, i32
  }
  func.func @transform_3(%arg0: i32) -> (i32, i32) {
    %c0_i32 = arith.constant 0 : i32
    %c0_i32_0 = arith.constant 0 : i32
    %c0_i32_1 = arith.constant 0 : i32
    return %c0_i32, %c0_i32_0 : i32, i32
  }
  func.func @transform_4(%arg0: i32) -> (i32, i32) {
    %c0_i32 = arith.constant 0 : i32
    %c0_i32_0 = arith.constant 0 : i32
    %c0_i32_1 = arith.constant 0 : i32
    return %c0_i32, %c0_i32_0 : i32, i32
  }
  func.func @transform_5(%arg0: i32) -> (i32, i32) {
    %c0_i32 = arith.constant 0 : i32
    %c0_i32_0 = arith.constant 0 : i32
    %c0_i32_1 = arith.constant 0 : i32
    return %c0_i32, %c0_i32_0 : i32, i32
  }
  func.func @transform_6(%arg0: i32) -> (i32, i32) {
    %c0_i32 = arith.constant 0 : i32
    %c0_i32_0 = arith.constant 0 : i32
    %c0_i32_1 = arith.constant 0 : i32
    return %c0_i32, %c0_i32_0 : i32, i32
  }
  func.func @transform_7(%arg0: i32) -> (i32, i32) {
    %c0_i32 = arith.constant 0 : i32
    %c0_i32_0 = arith.constant 0 : i32
    %c0_i32_1 = arith.constant 0 : i32
    return %c0_i32, %c0_i32_0 : i32, i32
  }
  func.func @transform_8(%arg0: i32) -> (i32, i32) {
    %c0_i32 = arith.constant 0 : i32
    %c0_i32_0 = arith.constant 0 : i32
    %c0_i32_1 = arith.constant 0 : i32
    return %c0_i32, %c0_i32_0 : i32, i32
  }
  func.func @transform_9(%arg0: i32) -> (i32, i32) {
    %c0_i32 = arith.constant 0 : i32
    %c0_i32_0 = arith.constant 0 : i32
    %c0_i32_1 = arith.constant 0 : i32
    return %c0_i32, %c0_i32_0 : i32, i32
  }
  func.func @transform_10(%arg0: i32) -> (i32, i32, i32, i32) {
    %c0_i32 = arith.constant 0 : i32
    %c0_i32_0 = arith.constant 0 : i32
    %c0_i32_1 = arith.constant 0 : i32
    %c0_i32_2 = arith.constant 0 : i32
    return %arg0, %c0_i32, %c0_i32_0, %c0_i32_1 : i32, i32, i32, i32
  }
}

</mosaic_0001>

<llo_original>
// kernel: tpu_custom_call.1
$region0: #{tpu_custom_call.1}
  #allocation0 [shape = 'u32[]', space=smem, size = 0x4, offset = 0x4, fixed_abs, tag = 'smem constant byte address 0x4 - core index']
  #allocation1 [shape = 'u32[144,128]{1,0:T(1,128)}', space=vmem, size = 0x12000, scoped, tag = 'internal scratch']
  #allocation2 [shape = 'f32[18,32,6]{2,1,0:T(8,128)}', space=vmem, size = 0x48000, scoped, tag = 'scratch operand']
  %s0 = inlined_call_operand.hbm [shape: f32[2,16,16,24], index: 0, kind: input, shape index: {}]
  %s1 = inlined_call_operand.vmem [shape: bf16[24,6], index: 1, kind: input, shape index: {}]
  %s2 = inlined_call_operand.vmem [shape: f32[1,6], index: 2, kind: input, shape index: {}]
  %s3 = inlined_call_operand.vmem [shape: f32[1,6], index: 3, kind: input, shape index: {}]
  %s4 = inlined_call_operand.vmem [shape: f32[9,6], index: 4, kind: input, shape index: {}]
  %s5 = inlined_call_operand.vmem [shape: f32[1,6], index: 5, kind: input, shape index: {}]
  %s6 = inlined_call_operand.vmem [shape: f32[1,6], index: 6, kind: input, shape index: {}]
  %s7 = inlined_call_operand.vmem [shape: bf16[6,24], index: 7, kind: input, shape index: {}]
  %s8 = inlined_call_operand.vmem [shape: f32[1,24], index: 8, kind: input, shape index: {}]
  %s9 = inlined_call_operand.vmem [shape: f32[1,24], index: 9, kind: input, shape index: {}]
  %s10 = inlined_call_operand.hbm [shape: f32[2,16,16,24], index: 10, kind: output, shape index: {}]
  %s11 = sld [smem:[#allocation0]]
  $region77: #{tpu_custom_call.1} parent=0
    _
  %s13 = ssub.s32 1, %s11
  %s14 = scalar_select 0, %s13, %s11
  $region1: #{tpu_custom_call.1} parent=0
    #allocation3 [shape = 'u8[262144]{0}', space=vmem, size = 0x40000, scoped, tag = 'input window, operand 0']
    #allocation4 [shape = 's32[2]{0}', space=sflag, size = 0x8, scoped, tag = 'scoped memory for tpu_custom_call.1']
    #allocation5 [shape = 's32[2]{0}', space=sflag, size = 0x8, scoped, tag = 'scoped memory for tpu_custom_call.1']
    #allocation6 [shape = 'u8[262144]{0}', space=vmem, size = 0x40000, scoped, tag = 'output window, operand 0']
    %15 = vsyncpa [#allocation4], 0
    %s16 = scalar_lea.sflag [#allocation4], 1
    %17 = vsyncpa %s16, 0
    %18 = vsyncpa [#allocation5], 0
    %s19 = scalar_lea.sflag [#allocation5], 1
    %20 = vsyncpa %s19, 0
    loop: start=0, step=1, limit=4
    $region2: #{tpu_custom_call.1} parent=1 // loop_pre_header
      _
    $region3: #{tpu_custom_call.1} parent=1 // loop_header
      %s22 = sphi 0, %s26
      %p23 = scmp.ge.s32.totalorder %s22, 4
      %s32 = sphi 0, %s34
      %s35 = sphi 0, %s32
      %s36 = sphi 0, %s35
      %s52 = sphi 0, %s36
      %s56 = sphi 0, %s56
      %s58 = sphi 0, %s56
      %s59 = sphi 0, %s58
      %s73 = sphi 0, %s59
      %s77 = sphi 0, %s77
      %s79 = sphi 0, %s77
      %s80 = sphi 0, %s79
      %s94 = sphi 0, %s80
      %s98 = sphi 0, %s98
      %s100 = sphi 0, %s98
      %s101 = sphi 0, %s100
      %s115 = sphi 0, %s101
      %s119 = sphi 0, %s119
      %s121 = sphi 0, %s119
      %s122 = sphi 0, %s121
      %s136 = sphi 0, %s122
      %s140 = sphi 0, %s140
      %s142 = sphi 0, %s140
      %s143 = sphi 0, %s142
      %s157 = sphi 0, %s143
      %s161 = sphi 0, %s161
      %s163 = sphi 0, %s161
      %s164 = sphi 0, %s163
      %s178 = sphi 0, %s164
      %s182 = sphi 0, %s182
      %s184 = sphi 0, %s182
      %s185 = sphi 0, %s184
      %s199 = sphi 0, %s185
      %s203 = sphi 0, %s203
      %s205 = sphi 0, %s203
      %s206 = sphi 0, %s205
      %s220 = sphi 0, %s206
      %s224 = sphi 0, %s224
      %s226 = sphi 0, %s224
      %s227 = sphi 0, %s226
      %s241 = sphi 0, %s227
      %s247 = sphi 0, %s249
      %s250 = sphi 0, %s247
      %s251 = sphi 0, %s250
      %s267 = sphi 0, %s251
    $region4: #{tpu_custom_call.1} parent=1 // loop_header_branch
      %25 = sbr.rel (%p23) target = $region8
    $region5: #{tpu_custom_call.1} parent=1 // loop_body
      %s27 = ssub.s32 %s22, 1
      %s28 = ssub.s32 %s22, 2
      %s29 = sadd.s32 %s22, 1
      %s30 = ssub.s32 %s22, %s29
      %p31 = scmp.eq.s32.totalorder %s30, 0
      %s33 = sadd.s32 %s32, 1
      %s34 = scalar_select %p31, %s32, %s33
      %p37 = pneg %p31
      %p38 = scmp.eq.s32.totalorder %s22, 1
      %p39 = por %p37, %p38
      %p40 = scmp.ne.s32.totalorder %s32, %s35
      %p41 = scmp.eq.s32.totalorder %s22, 0
      %p42 = por %p40, %p41
      %p43 = scmp.ne.s32.totalorder %s32, %s35
      %p44 = scmp.eq.s32.totalorder %s27, 1
      %p45 = por %p43, %p44
      %p46 = scmp.ne.s32.totalorder %s35, %s36
      %p47 = scmp.eq.s32.totalorder %s27, 0
      %p48 = por %p46, %p47
      %p49 = scmp.ne.s32.totalorder %s35, %s36
      %p50 = scmp.eq.s32.totalorder %s28, 1
      %p51 = por %p49, %p50
      %p53 = scmp.ne.s32.totalorder %s36, %s52
      %p54 = scmp.eq.s32.totalorder %s28, 0
      %p55 = por %p53, %p54
      %s57 = sadd.s32 %s56, 1
      %p60 = scmp.eq.s32.totalorder %s22, 1
      %p61 = scmp.ne.s32.totalorder %s56, %s58
      %p62 = scmp.eq.s32.totalorder %s22, 0
      %p63 = por %p61, %p62
      %p64 = scmp.ne.s32.totalorder %s56, %s58
      %p65 = scmp.eq.s32.totalorder %s27, 1
      %p66 = por %p64, %p65
      %p67 = scmp.ne.s32.totalorder %s58, %s59
      %p68 = scmp.eq.s32.totalorder %s27, 0
      %p69 = por %p67, %p68
      %p70 = scmp.ne.s32.totalorder %s58, %s59
      %p71 = scmp.eq.s32.totalorder %s28, 1
      %p72 = por %p70, %p71
      %p74 = scmp.ne.s32.totalorder %s59, %s73
      %p75 = scmp.eq.s32.totalorder %s28, 0
      %p76 = por %p74, %p75
      %s78 = sadd.s32 %s77, 1
      %p81 = scmp.eq.s32.totalorder %s22, 1
      %p82 = scmp.ne.s32.totalorder %s77, %s79
      %p83 = scmp.eq.s32.totalorder %s22, 0
      %p84 = por %p82, %p83
      %p85 = scmp.ne.s32.totalorder %s77, %s79
      %p86 = scmp.eq.s32.totalorder %s27, 1
      %p87 = por %p85, %p86
      %p88 = scmp.ne.s32.totalorder %s79, %s80
      %p89 = scmp.eq.s32.totalorder %s27, 0
      %p90 = por %p88, %p89
      %p91 = scmp.ne.s32.totalorder %s79, %s80
      %p92 = scmp.eq.s32.totalorder %s28, 1
      %p93 = por %p91, %p92
      %p95 = scmp.ne.s32.totalorder %s80, %s94
      %p96 = scmp.eq.s32.totalorder %s28, 0
      %p97 = por %p95, %p96
      %s99 = sadd.s32 %s98, 1
      %p102 = scmp.eq.s32.totalorder %s22, 1
      %p103 = scmp.ne.s32.totalorder %s98, %s100
      %p104 = scmp.eq.s32.totalorder %s22, 0
      %p105 = por %p103, %p104
      %p106 = scmp.ne.s32.totalorder %s98, %s100
      %p107 = scmp.eq.s32.totalorder %s27, 1
      %p108 = por %p106, %p107
      %p109 = scmp.ne.s32.totalorder %s100, %s101
      %p110 = scmp.eq.s32.totalorder %s27, 0
      %p111 = por %p109, %p110
      %p112 = scmp.ne.s32.totalorder %s100, %s101
      %p113 = scmp.eq.s32.totalorder %s28, 1
      %p114 = por %p112, %p113
      %p116 = scmp.ne.s32.totalorder %s101, %s115
      %p117 = scmp.eq.s32.totalorder %s28, 0
      %p118 = por %p116, %p117
      %s120 = sadd.s32 %s119, 1
      %p123 = scmp.eq.s32.totalorder %s22, 1
      %p124 = scmp.ne.s32.totalorder %s119, %s121
      %p125 = scmp.eq.s32.totalorder %s22, 0
      %p126 = por %p124, %p125
      %p127 = scmp.ne.s32.totalorder %s119, %s121
      %p128 = scmp.eq.s32.totalorder %s27, 1
      %p129 = por %p127, %p128
      %p130 = scmp.ne.s32.totalorder %s121, %s122
      %p131 = scmp.eq.s32.totalorder %s27, 0
      %p132 = por %p130, %p131
      %p133 = scmp.ne.s32.totalorder %s121, %s122
      %p134 = scmp.eq.s32.totalorder %s28, 1
      %p135 = por %p133, %p134
      %p137 = scmp.ne.s32.totalorder %s122, %s136
      %p138 = scmp.eq.s32.totalorder %s28, 0
      %p139 = por %p137, %p138
      %s141 = sadd.s32 %s140, 1
      %p144 = scmp.eq.s32.totalorder %s22, 1
      %p145 = scmp.ne.s32.totalorder %s140, %s142
      %p146 = scmp.eq.s32.totalorder %s22, 0
      %p147 = por %p145, %p146
      %p148 = scmp.ne.s32.totalorder %s140, %s142
      %p149 = scmp.eq.s32.totalorder %s27, 1
      %p150 = por %p148, %p149
      %p151 = scmp.ne.s32.totalorder %s142, %s143
      %p152 = scmp.eq.s32.totalorder %s27, 0
      %p153 = por %p151, %p152
      %p154 = scmp.ne.s32.totalorder %s142, %s143
      %p155 = scmp.eq.s32.totalorder %s28, 1
      %p156 = por %p154, %p155
      %p158 = scmp.ne.s32.totalorder %s143, %s157
      %p159 = scmp.eq.s32.totalorder %s28, 0
      %p160 = por %p158, %p159
      %s162 = sadd.s32 %s161, 1
      %p165 = scmp.eq.s32.totalorder %s22, 1
      %p166 = scmp.ne.s32.totalorder %s161, %s163
      %p167 = scmp.eq.s32.totalorder %s22, 0
      %p168 = por %p166, %p167
      %p169 = scmp.ne.s32.totalorder %s161, %s163
      %p170 = scmp.eq.s32.totalorder %s27, 1
      %p171 = por %p169, %p170
      %p172 = scmp.ne.s32.totalorder %s163, %s164
      %p173 = scmp.eq.s32.totalorder %s27, 0
      %p174 = por %p172, %p173
      %p175 = scmp.ne.s32.totalorder %s163, %s164
      %p176 = scmp.eq.s32.totalorder %s28, 1
      %p177 = por %p175, %p176
      %p179 = scmp.ne.s32.totalorder %s164, %s178
      %p180 = scmp.eq.s32.totalorder %s28, 0
      %p181 = por %p179, %p180
      %s183 = sadd.s32 %s182, 1
      %p186 = scmp.eq.s32.totalorder %s22, 1
      %p187 = scmp.ne.s32.totalorder %s182, %s184
      %p188 = scmp.eq.s32.totalorder %s22, 0
      %p189 = por %p187, %p188
      %p190 = scmp.ne.s32.totalorder %s182, %s184
      %p191 = scmp.eq.s32.totalorder %s27, 1
      %p192 = por %p190, %p191
      %p193 = scmp.ne.s32.totalorder %s184, %s185
      %p194 = scmp.eq.s32.totalorder %s27, 0
      %p195 = por %p193, %p194
      %p196 = scmp.ne.s32.totalorder %s184, %s185
      %p197 = scmp.eq.s32.totalorder %s28, 1
      %p198 = por %p196, %p197
      %p200 = scmp.ne.s32.totalorder %s185, %s199
      %p201 = scmp.eq.s32.totalorder %s28, 0
      %p202 = por %p200, %p201
      %s204 = sadd.s32 %s203, 1
      %p207 = scmp.eq.s32.totalorder %s22, 1
      %p208 = scmp.ne.s32.totalorder %s203, %s205
      %p209 = scmp.eq.s32.totalorder %s22, 0
      %p210 = por %p208, %p209
      %p211 = scmp.ne.s32.totalorder %s203, %s205
      %p212 = scmp.eq.s32.totalorder %s27, 1
      %p213 = por %p211, %p212
      %p214 = scmp.ne.s32.totalorder %s205, %s206
      %p215 = scmp.eq.s32.totalorder %s27, 0
      %p216 = por %p214, %p215
      %p217 = scmp.ne.s32.totalorder %s205, %s206
      %p218 = scmp.eq.s32.totalorder %s28, 1
      %p219 = por %p217, %p218
      %p221 = scmp.ne.s32.totalorder %s206, %s220
      %p222 = scmp.eq.s32.totalorder %s28, 0
      %p223 = por %p221, %p222
      %s225 = sadd.s32 %s224, 1
      %p228 = scmp.eq.s32.totalorder %s22, 1
      %p229 = scmp.ne.s32.totalorder %s224, %s226
      %p230 = scmp.eq.s32.totalorder %s22, 0
      %p231 = por %p229, %p230
      %p232 = scmp.ne.s32.totalorder %s224, %s226
      %p233 = scmp.eq.s32.totalorder %s27, 1
      %p234 = por %p232, %p233
      %p235 = scmp.ne.s32.totalorder %s226, %s227
      %p236 = scmp.eq.s32.totalorder %s27, 0
      %p237 = por %p235, %p236
      %p238 = scmp.ne.s32.totalorder %s226, %s227
      %p239 = scmp.eq.s32.totalorder %s28, 1
      %p240 = por %p238, %p239
      %p242 = scmp.ne.s32.totalorder %s227, %s241
      %p243 = scmp.eq.s32.totalorder %s28, 0
      %p244 = por %p242, %p243
      %s245 = ssub.s32 %s22, %s29
      %p246 = scmp.eq.s32.totalorder %s245, 0
      %s248 = sadd.s32 %s247, 1
      %s249 = scalar_select %p246, %s247, %s248
      %p252 = pneg %p246
      %p253 = scmp.eq.s32.totalorder %s22, 1
      %p254 = por %p252, %p253
      %p255 = scmp.ne.s32.totalorder %s247, %s250
      %p256 = scmp.eq.s32.totalorder %s22, 0
      %p257 = por %p255, %p256
      %p258 = scmp.ne.s32.totalorder %s247, %s250
      %p259 = scmp.eq.s32.totalorder %s27, 1
      %p260 = por %p258, %p259
      %p261 = scmp.ne.s32.totalorder %s250, %s251
      %p262 = scmp.eq.s32.totalorder %s27, 0
      %p263 = por %p261, %p262
      %p264 = scmp.ne.s32.totalorder %s250, %s251
      %p265 = scmp.eq.s32.totalorder %s28, 1
      %p266 = por %p264, %p265
      %p268 = scmp.ne.s32.totalorder %s251, %s267
      %p269 = scmp.eq.s32.totalorder %s28, 0
      %p270 = por %p268, %p269
      %p271 = scmp.le.s32.totalorder 1, %s22
      %p272 = scmp.lt.s32.totalorder %s22, 3
      %p273 = pnand %p271, %p272
      %p274 = pneg %p273
      // Predicated region
      $region9: #{tpu_custom_call.1} parent=5 // pred_check
        _
      $region10: #{tpu_custom_call.1} parent=5 // pred_check_branch
        %276 = sbr.rel (%p273) target = $region12
      $region11: #{tpu_custom_call.1} parent=5 // pred_region
        %s277 = ssub.s32 %s22, 1
        // Predicated region
        $region13: #{tpu_custom_call.1} parent=11 // pred_check
          %p278 = pneg %p69
        $region14: #{tpu_custom_call.1} parent=11 // pred_check_branch
          %280 = sbr.rel (%p278) target = $region16
        $region15: #{tpu_custom_call.1} parent=11 // pred_region
          _
        $region16: #{tpu_custom_call.1} parent=11 // pred_fallthru
          _
        // Predicated region
        $region17: #{tpu_custom_call.1} parent=11 // pred_check
          %p281 = pneg %p90
        $region18: #{tpu_custom_call.1} parent=11 // pred_check_branch
          %283 = sbr.rel (%p281) target = $region20
        $region19: #{tpu_custom_call.1} parent=11 // pred_region
          _
        $region20: #{tpu_custom_call.1} parent=11 // pred_fallthru
          _
        // Predicated region
        $region21: #{tpu_custom_call.1} parent=11 // pred_check
          %p284 = pneg %p111
        $region22: #{tpu_custom_call.1} parent=11 // pred_check_branch
          %286 = sbr.rel (%p284) target = $region24
        $region23: #{tpu_custom_call.1} parent=11 // pred_region
          _
        $region24: #{tpu_custom_call.1} parent=11 // pred_fallthru
          _
        // Predicated region
        $region25: #{tpu_custom_call.1} parent=11 // pred_check
          %p287 = pneg %p132
        $region26: #{tpu_custom_call.1} parent=11 // pred_check_branch
          %289 = sbr.rel (%p287) target = $region28
        $region27: #{tpu_custom_call.1} parent=11 // pred_region
          _
        $region28: #{tpu_custom_call.1} parent=11 // pred_fallthru
          _
        // Predicated region
        $region29: #{tpu_custom_call.1} parent=11 // pred_check
          %p290 = pneg %p153
        $region30: #{tpu_custom_call.1} parent=11 // pred_check_branch
          %292 = sbr.rel (%p290) target = $region32
        $region31: #{tpu_custom_call.1} parent=11 // pred_region
          _
        $region32: #{tpu_custom_call.1} parent=11 // pred_fallthru
          _
        // Predicated region
        $region33: #{tpu_custom_call.1} parent=11 // pred_check
          %p293 = pneg %p174
        $region34: #{tpu_custom_call.1} parent=11 // pred_check_branch
          %295 = sbr.rel (%p293) target = $region36
        $region35: #{tpu_custom_call.1} parent=11 // pred_region
          _
        $region36: #{tpu_custom_call.1} parent=11 // pred_fallthru
          _
        // Predicated region
        $region37: #{tpu_custom_call.1} parent=11 // pred_check
          %p296 = pneg %p195
        $region38: #{tpu_custom_call.1} parent=11 // pred_check_branch
          %298 = sbr.rel (%p296) target = $region40
        $region39: #{tpu_custom_call.1} parent=11 // pred_region
          _
        $region40: #{tpu_custom_call.1} parent=11 // pred_fallthru
          _
        // Predicated region
        $region41: #{tpu_custom_call.1} parent=11 // pred_check
          %p299 = pneg %p216
        $region42: #{tpu_custom_call.1} parent=11 // pred_check_branch
          %301 = sbr.rel (%p299) target = $region44
        $region43: #{tpu_custom_call.1} parent=11 // pred_region
          _
        $region44: #{tpu_custom_call.1} parent=11 // pred_fallthru
          _
        // Predicated region
        $region45: #{tpu_custom_call.1} parent=11 // pred_check
          %p302 = pneg %p237
        $region46: #{tpu_custom_call.1} parent=11 // pred_check_branch
          %304 = sbr.rel (%p302) target = $region48
        $region47: #{tpu_custom_call.1} parent=11 // pred_region
          _
        $region48: #{tpu_custom_call.1} parent=11 // pred_fallthru
          _
      $region12: #{tpu_custom_call.1} parent=5 // pred_fallthru
        _
      %p305 = scmp.lt.s32.totalorder %s22, 2
      // Predicated region
      $region49: #{tpu_custom_call.1} parent=5 // pred_check
        %p306 = pneg %p305
      $region50: #{tpu_custom_call.1} parent=5 // pred_check_branch
        %308 = sbr.rel (%p306) target = $region52
      $region51: #{tpu_custom_call.1} parent=5 // pred_region
        // Predicated region
        $region53: #{tpu_custom_call.1} parent=51 // pred_check
          %p309 = pneg %p42
        $region54: #{tpu_custom_call.1} parent=51 // pred_check_branch
          %311 = sbr.rel (%p309) target = $region56
        $region55: #{tpu_custom_call.1} parent=51 // pred_region
          %s312 = sand.u32 %s32, 1
          %s313 = scalar_lea.sflag [#allocation4], %s312
          %s314 = sand.u32 %s32, 1
          %s315 = smul.addr %s314, 256
          %s316 = scalar_lea.vmem [#allocation3], %s315
          %s318 = ssub.s32 4096, 4096
          %319 = vsyncadd %s313, %s318
          %s320 = smul.addr %s22, 32
          %s321 = smul.addr %s320, 128
          %s322 = scalar_lea.hbm %s0, %s321
          %s323 = sshll.u32 %s316, 4
          %s324 = int_to_ptr.vmem [resolvable:$true] %s323
          %329 = dma.hbm_to_vmem [thread:$0]  %s322, 4096, %s324, %s313, 128, 128, 8
        $region56: #{tpu_custom_call.1} parent=51 // pred_fallthru
          _
      $region52: #{tpu_custom_call.1} parent=5 // pred_fallthru
        _
      %p330 = scmp.le.s32.totalorder 1, %s22
      %p331 = scmp.lt.s32.totalorder %s22, 3
      %p332 = pnand %p330, %p331
      %p333 = pneg %p332
      // Predicated region
      $region57: #{tpu_custom_call.1} parent=5 // pred_check
        _
      $region58: #{tpu_custom_call.1} parent=5 // pred_check_branch
        %335 = sbr.rel (%p332) target = $region60
      $region59: #{tpu_custom_call.1} parent=5 // pred_region
        %s336 = ssub.s32 %s22, 1
        %s337 = sand.u32 %s35, 1
        %s338 = scalar_lea.sflag [#allocation4], %s337
        %s339 = sand.u32 %s35, 1
        %s340 = smul.addr %s339, 256
        %s341 = scalar_lea.vmem [#allocation3], %s340
        // Predicated region
        $region61: #{tpu_custom_call.1} parent=59 // pred_check
          %p342 = pneg %p48
        $region62: #{tpu_custom_call.1} parent=59 // pred_check_branch
          %344 = sbr.rel (%p342) target = $region64
        $region63: #{tpu_custom_call.1} parent=59 // pred_region
          %345 = dma.done %s338, 4096
        $region64: #{tpu_custom_call.1} parent=59 // pred_fallthru
          _
        %s346 = sand.u32 %s35, 1
        %s347 = scalar_lea.sflag [#allocation4], %s346
        %s348 = sand.u32 %s35, 1
        %s349 = smul.addr %s348, 256
        %s350 = scalar_lea.vmem [#allocation3], %s349
        %p351 = pneg %p48
        %p352 = pneg %p45
        %p353 = pneg %p69
        %p354 = pneg %p66
        %p355 = pneg %p90
        %p356 = pneg %p87
        %p357 = pneg %p111
        %p358 = pneg %p108
        %p359 = pneg %p132
        %p360 = pneg %p129
        %p361 = pneg %p153
        %p362 = pneg %p150
        %p363 = pneg %p174
        %p364 = pneg %p171
        %p365 = pneg %p195
        %p366 = pneg %p192
        %p367 = pneg %p216
        %p368 = pneg %p213
        %p369 = pneg %p237
        %p370 = pneg %p234
        %p371 = pneg %p263
        %p372 = pneg %p260
        %s373 = sand.u32 %s250, 1
        %s374 = scalar_lea.sflag [#allocation5], %s373
        %s375 = sand.u32 %s250, 1
        %s376 = smul.addr %s375, 256
        %s377 = scalar_lea.vmem [#allocation6], %s376
        %v379 = vld [vmem:[%s341] sm:$0xff]
        %v380 = vld [vmem:[%s341 + $0x8] sm:$0xff]
        %v381 = vld [vmem:[%s341 + $0x10] sm:$0xff]
        %v382 = vld [vmem:[%s341 + $0x18] sm:$0xff]
        %v383 = vld [vmem:[%s341 + $0x20] sm:$0xff]
        %v384 = vld [vmem:[%s341 + $0x28] sm:$0xff]
        %v385 = vld [vmem:[%s341 + $0x30] sm:$0xff]
        %v386 = vld [vmem:[%s341 + $0x38] sm:$0xff]
        %v387 = vld [vmem:[%s341 + $0x40] sm:$0xff]
        %v388 = vld [vmem:[%s341 + $0x48] sm:$0xff]
        %v389 = vld [vmem:[%s341 + $0x50] sm:$0xff]
        %v390 = vld [vmem:[%s341 + $0x58] sm:$0xff]
        %v391 = vld [vmem:[%s341 + $0x60] sm:$0xff]
        %v392 = vld [vmem:[%s341 + $0x68] sm:$0xff]
        %v393 = vld [vmem:[%s341 + $0x70] sm:$0xff]
        %v394 = vld [vmem:[%s341 + $0x78] sm:$0xff]
        %v395 = vld [vmem:[%s341 + $0x80] sm:$0xff]
        %v396 = vld [vmem:[%s341 + $0x88] sm:$0xff]
        %v397 = vld [vmem:[%s341 + $0x90] sm:$0xff]
        %v398 = vld [vmem:[%s341 + $0x98] sm:$0xff]
        %v399 = vld [vmem:[%s341 + $0xa0] sm:$0xff]
        %v400 = vld [vmem:[%s341 + $0xa8] sm:$0xff]
        %v401 = vld [vmem:[%s341 + $0xb0] sm:$0xff]
        %v402 = vld [vmem:[%s341 + $0xb8] sm:$0xff]
        %v403 = vld [vmem:[%s341 + $0xc0] sm:$0xff]
        %v404 = vld [vmem:[%s341 + $0xc8] sm:$0xff]
        %v405 = vld [vmem:[%s341 + $0xd0] sm:$0xff]
        %v406 = vld [vmem:[%s341 + $0xd8] sm:$0xff]
        %v407 = vld [vmem:[%s341 + $0xe0] sm:$0xff]
        %v408 = vld [vmem:[%s341 + $0xe8] sm:$0xff]
        %v409 = vld [vmem:[%s341 + $0xf0] sm:$0xff]
        %v410 = vld [vmem:[%s341 + $0xf8] sm:$0xff]
        %v411 = vpack.c.bf16 %v380, %v379
        %v412 = vpack.c.bf16 %v382, %v381
        %v413 = vpack.c.bf16 %v384, %v383
        %v414 = vpack.c.bf16 %v386, %v385
        %v415 = vpack.c.bf16 %v388, %v387
        %v416 = vpack.c.bf16 %v390, %v389
        %v417 = vpack.c.bf16 %v392, %v391
        %v418 = vpack.c.bf16 %v394, %v393
        %v419 = vpack.c.bf16 %v396, %v395
        %v420 = vpack.c.bf16 %v398, %v397
        %v421 = vpack.c.bf16 %v400, %v399
        %v422 = vpack.c.bf16 %v402, %v401
        %v423 = vpack.c.bf16 %v404, %v403
        %v424 = vpack.c.bf16 %v406, %v405
        %v425 = vpack.c.bf16 %v408, %v407
        %v426 = vpack.c.bf16 %v410, %v409
        %v427 = vld [vmem:[%s1] sm:$0xf]
        %v428 = vld [vmem:[%s1 + $0x4] sm:$0xf]
        %v429 = vld [vmem:[%s1 + $0x8] sm:$0xf]
        %v433 = vunpack.c.l.b16 %v427
        %v434 = vunpack.c.l.b16 %v428
        %v435 = vunpack.c.l.b16 %v429
        %v436 = vpack.c.b16 %v434, %v433
        %v437 = vpack.c.b16 %v435, %v435
        %vm439 = vcmask 195584
        %v441 = vsel %vm439, %v411, 0
        %v444 = vsel %vm439, %v412, 0
        %v447 = vsel %vm439, %v413, 0
        %v450 = vsel %vm439, %v414, 0
        %v453 = vsel %vm439, %v415, 0
        %v456 = vsel %vm439, %v416, 0
        %v459 = vsel %vm439, %v417, 0
        %v462 = vsel %vm439, %v418, 0
        %v465 = vsel %vm439, %v419, 0
        %v468 = vsel %vm439, %v420, 0
        %v471 = vsel %vm439, %v421, 0
        %v474 = vsel %vm439, %v422, 0
        %v477 = vsel %vm439, %v423, 0
        %v480 = vsel %vm439, %v424, 0
        %v483 = vsel %vm439, %v425, 0
        %v486 = vsel %vm439, %v426, 0
        %vm488 = vcmask 1043456
        %v490 = vsel %vm488, %v437, 0
        %492 = vmatprep.subr.bf16.mxu0 0
        %493 = vmatpush1.bf16.msra.mxu0 0
        %494 = vmatprep.subr.bf16.mxu0 0
        %495 = vmatpush1.bf16.msra.mxu0 0
        %496 = vmatprep.subr.bf16.mxu0 0
        %497 = vmatpush1.bf16.msra.mxu0 0
        %498 = vmatprep.subr.bf16.mxu0 0
        %499 = vmatpush1.bf16.msra.mxu0 0
        %500 = vmatprep.subr.bf16.mxu0 0
        %501 = vmatpush1.bf16.msra.mxu0 0
        %502 = vmatprep.subr.bf16.mxu0 0
        %503 = vmatpush1.bf16.msra.mxu0 0
        %504 = vmatprep.subr.bf16.mxu0 0
        %505 = vmatpush1.bf16.msra.mxu0 %v490
        %506 = vmatprep.subr.bf16.mxu0 0
        %507 = vmatpush1.bf16.msra.mxu0 %v436
        %508 = vmatprep.subr.bf16.mxu0 0
        %509 = vmatpush2.bf16.msra.mxu0 0
        %510 = vmatprep.subr.bf16.mxu0 0
        %511 = vmatpush2.bf16.msra.mxu0 0
        %512 = vmatprep.subr.bf16.mxu0 0
        %513 = vmatpush2.bf16.msra.mxu0 0
        %514 = vmatprep.subr.bf16.mxu0 0
        %515 = vmatpush2.bf16.msra.mxu0 0
        %516 = vmatprep.subr.bf16.mxu0 0
        %517 = vmatpush2.bf16.msra.mxu0 0
        %518 = vmatprep.subr.bf16.mxu0 0
        %519 = vmatpush2.bf16.msra.mxu0 0
        %520 = vmatprep.subr.bf16.mxu0 0
        %521 = vmatpush2.bf16.msra.mxu0 0
        %522 = vmatprep.subr.bf16.mxu0 0
        %523 = vmatpush2.bf16.msra.mxu0 0
        %524 = vmatprep.mubr.bf16.mxu0 0
        %525 = vmatmul.mubr.bf16.gmra.mxu0 %v441
        %v526 = vpop.f32.mrf.mxu0
        %v527 = vadd.f32 0.0, %v526
        %v528 = vpop.f32.mrf.mxu0
        %v529 = vpop.f32.mrf.mxu0
        %v530 = vadd.f32 0.0, %v529
        %v531 = vpop.f32.mrf.mxu0
        %532 = vmatprep.mubr.bf16.mxu0 0
        %533 = vmatmul.mubr.bf16.gmra.mxu0 %v444
        %v534 = vpop.f32.mrf.mxu0
        %v535 = vadd.f32 0.0, %v534
        %v536 = vpop.f32.mrf.mxu0
        %v537 = vpop.f32.mrf.mxu0
        %v538 = vadd.f32 0.0, %v537
        %v539 = vpop.f32.mrf.mxu0
        %540 = vmatprep.mubr.bf16.mxu0 0
        %541 = vmatmul.mubr.bf16.gmra.mxu0 %v447
        %v542 = vpop.f32.mrf.mxu0
        %v543 = vadd.f32 0.0, %v542
        %v544 = vpop.f32.mrf.mxu0
        %v545 = vpop.f32.mrf.mxu0
        %v546 = vadd.f32 0.0, %v545
        %v547 = vpop.f32.mrf.mxu0
        %548 = vmatprep.mubr.bf16.mxu0 0
        %549 = vmatmul.mubr.bf16.gmra.mxu0 %v450
        %v550 = vpop.f32.mrf.mxu0
        %v551 = vadd.f32 0.0, %v550
        %v552 = vpop.f32.mrf.mxu0
        %v553 = vpop.f32.mrf.mxu0
        %v554 = vadd.f32 0.0, %v553
        %v555 = vpop.f32.mrf.mxu0
        %556 = vmatprep.mubr.bf16.mxu0 0
        %557 = vmatmul.mubr.bf16.gmra.mxu0 %v453
        %v558 = vpop.f32.mrf.mxu0
        %v559 = vadd.f32 0.0, %v558
        %v560 = vpop.f32.mrf.mxu0
        %v561 = vpop.f32.mrf.mxu0
        %v562 = vadd.f32 0.0, %v561
        %v563 = vpop.f32.mrf.mxu0
        %564 = vmatprep.mubr.bf16.mxu0 0
        %565 = vmatmul.mubr.bf16.gmra.mxu0 %v456
        %v566 = vpop.f32.mrf.mxu0
        %v567 = vadd.f32 0.0, %v566
        %v568 = vpop.f32.mrf.mxu0
        %v569 = vpop.f32.mrf.mxu0
        %v570 = vadd.f32 0.0, %v569
        %v571 = vpop.f32.mrf.mxu0
        %572 = vmatprep.mubr.bf16.mxu0 0
        %573 = vmatmul.mubr.bf16.gmra.mxu0 %v459
        %v574 = vpop.f32.mrf.mxu0
        %v575 = vadd.f32 0.0, %v574
        %v576 = vpop.f32.mrf.mxu0
        %v577 = vpop.f32.mrf.mxu0
        %v578 = vadd.f32 0.0, %v577
        %v579 = vpop.f32.mrf.mxu0
        %580 = vmatprep.mubr.bf16.mxu0 0
        %581 = vmatmul.mubr.bf16.gmra.mxu0 %v462
        %v582 = vpop.f32.mrf.mxu0
        %v583 = vadd.f32 0.0, %v582
        %v584 = vpop.f32.mrf.mxu0
        %v585 = vpop.f32.mrf.mxu0
        %v586 = vadd.f32 0.0, %v585
        %v587 = vpop.f32.mrf.mxu0
        %588 = vmatprep.mubr.bf16.mxu0 0
        %589 = vmatmul.mubr.bf16.gmra.mxu0 %v465
        %v590 = vpop.f32.mrf.mxu0
        %v591 = vadd.f32 0.0, %v590
        %v592 = vpop.f32.mrf.mxu0
        %v593 = vpop.f32.mrf.mxu0
        %v594 = vadd.f32 0.0, %v593
        %v595 = vpop.f32.mrf.mxu0
        %596 = vmatprep.mubr.bf16.mxu0 0
        %597 = vmatmul.mubr.bf16.gmra.mxu0 %v468
        %v598 = vpop.f32.mrf.mxu0
        %v599 = vadd.f32 0.0, %v598
        %v600 = vpop.f32.mrf.mxu0
        %v601 = vpop.f32.mrf.mxu0
        %v602 = vadd.f32 0.0, %v601
        %v603 = vpop.f32.mrf.mxu0
        %604 = vmatprep.mubr.bf16.mxu0 0
        %605 = vmatmul.mubr.bf16.gmra.mxu0 %v471
        %v606 = vpop.f32.mrf.mxu0
        %v607 = vadd.f32 0.0, %v606
        %v608 = vpop.f32.mrf.mxu0
        %v609 = vpop.f32.mrf.mxu0
        %v610 = vadd.f32 0.0, %v609
        %v611 = vpop.f32.mrf.mxu0
        %612 = vmatprep.mubr.bf16.mxu0 0
        %613 = vmatmul.mubr.bf16.gmra.mxu0 %v474
        %v614 = vpop.f32.mrf.mxu0
        %v615 = vadd.f32 0.0, %v614
        %v616 = vpop.f32.mrf.mxu0
        %v617 = vpop.f32.mrf.mxu0
        %v618 = vadd.f32 0.0, %v617
        %v619 = vpop.f32.mrf.mxu0
        %620 = vmatprep.mubr.bf16.mxu0 0
        %621 = vmatmul.mubr.bf16.gmra.mxu0 %v477
        %v622 = vpop.f32.mrf.mxu0
        %v623 = vadd.f32 0.0, %v622
        %v624 = vpop.f32.mrf.mxu0
        %v625 = vpop.f32.mrf.mxu0
        %v626 = vadd.f32 0.0, %v625
        %v627 = vpop.f32.mrf.mxu0
        %628 = vmatprep.mubr.bf16.mxu0 0
        %629 = vmatmul.mubr.bf16.gmra.mxu0 %v480
        %v630 = vpop.f32.mrf.mxu0
        %v631 = vadd.f32 0.0, %v630
        %v632 = vpop.f32.mrf.mxu0
        %v633 = vpop.f32.mrf.mxu0
        %v634 = vadd.f32 0.0, %v633
        %v635 = vpop.f32.mrf.mxu0
        %636 = vmatprep.mubr.bf16.mxu0 0
        %637 = vmatmul.mubr.bf16.gmra.mxu0 %v483
        %v638 = vpop.f32.mrf.mxu0
        %v639 = vadd.f32 0.0, %v638
        %v640 = vpop.f32.mrf.mxu0
        %v641 = vpop.f32.mrf.mxu0
        %v642 = vadd.f32 0.0, %v641
        %v643 = vpop.f32.mrf.mxu0
        %644 = vmatprep.mubr.bf16.mxu0 0
        %645 = vmatmul.mubr.bf16.gmra.mxu0 %v486
        %v646 = vpop.f32.mrf.mxu0
        %v647 = vadd.f32 0.0, %v646
        %v648 = vpop.f32.mrf.mxu0
        %v649 = vpop.f32.mrf.mxu0
        %v650 = vadd.f32 0.0, %v649
        %v651 = vpop.f32.mrf.mxu0
        %652 = vdwg.mxu0
        %v653 = vld [vmem:[%s2] sm:$0x1]
        %v655 = vlaneseq
        %v656 = vshrl.u32 %v655, 7
        %v657 = vsub.s32 0, %v656
        %v658 = vrot.slane %v653, %v657
        %v660 = vmul.f32 %v527, %v658
        %v661 = vmul.f32 %v530, %v658
        %v662 = vmul.f32 %v535, %v658
        %v663 = vmul.f32 %v538, %v658
        %v664 = vmul.f32 %v543, %v658
        %v665 = vmul.f32 %v546, %v658
        %v666 = vmul.f32 %v551, %v658
        %v667 = vmul.f32 %v554, %v658
        %v668 = vmul.f32 %v559, %v658
        %v669 = vmul.f32 %v562, %v658
        %v670 = vmul.f32 %v567, %v658
        %v671 = vmul.f32 %v570, %v658
        %v672 = vmul.f32 %v575, %v658
        %v673 = vmul.f32 %v578, %v658
        %v674 = vmul.f32 %v583, %v658
        %v675 = vmul.f32 %v586, %v658
        %v676 = vmul.f32 %v591, %v658
        %v677 = vmul.f32 %v594, %v658
        %v678 = vmul.f32 %v599, %v658
        %v679 = vmul.f32 %v602, %v658
        %v680 = vmul.f32 %v607, %v658
        %v681 = vmul.f32 %v610, %v658
        %v682 = vmul.f32 %v615, %v658
        %v683 = vmul.f32 %v618, %v658
        %v684 = vmul.f32 %v623, %v658
        %v685 = vmul.f32 %v626, %v658
        %v686 = vmul.f32 %v631, %v658
        %v687 = vmul.f32 %v634, %v658
        %v688 = vmul.f32 %v639, %v658
        %v689 = vmul.f32 %v642, %v658
        %v690 = vmul.f32 %v647, %v658
        %v691 = vmul.f32 %v650, %v658
        %v692 = vld [vmem:[%s3] sm:$0x1]
        %v694 = vlaneseq
        %v695 = vshrl.u32 %v694, 7
        %v696 = vsub.s32 0, %v695
        %v697 = vrot.slane %v692, %v696
        %v699 = vadd.f32 %v660, %v697
        %v700 = vadd.f32 %v661, %v697
        %v701 = vadd.f32 %v662, %v697
        %v702 = vadd.f32 %v663, %v697
        %v703 = vadd.f32 %v664, %v697
        %v704 = vadd.f32 %v665, %v697
        %v705 = vadd.f32 %v666, %v697
        %v706 = vadd.f32 %v667, %v697
        %v707 = vadd.f32 %v668, %v697
        %v708 = vadd.f32 %v669, %v697
        %v709 = vadd.f32 %v670, %v697
        %v710 = vadd.f32 %v671, %v697
        %v711 = vadd.f32 %v672, %v697
        %v712 = vadd.f32 %v673, %v697
        %v713 = vadd.f32 %v674, %v697
        %v714 = vadd.f32 %v675, %v697
        %v715 = vadd.f32 %v676, %v697
        %v716 = vadd.f32 %v677, %v697
        %v717 = vadd.f32 %v678, %v697
        %v718 = vadd.f32 %v679, %v697
        %v719 = vadd.f32 %v680, %v697
        %v720 = vadd.f32 %v681, %v697
        %v721 = vadd.f32 %v682, %v697
        %v722 = vadd.f32 %v683, %v697
        %v723 = vadd.f32 %v684, %v697
        %v724 = vadd.f32 %v685, %v697
        %v725 = vadd.f32 %v686, %v697
        %v726 = vadd.f32 %v687, %v697
        %v727 = vadd.f32 %v688, %v697
        %v728 = vadd.f32 %v689, %v697
        %v729 = vadd.f32 %v690, %v697
        %v730 = vadd.f32 %v691, %v697
        %v731 = vmax.f32 %v699, 0.0
        %v732 = vmax.f32 %v700, 0.0
        %v733 = vmax.f32 %v701, 0.0
        %v734 = vmax.f32 %v702, 0.0
        %v735 = vmax.f32 %v703, 0.0
        %v736 = vmax.f32 %v704, 0.0
        %v737 = vmax.f32 %v705, 0.0
        %v738 = vmax.f32 %v706, 0.0
        %v739 = vmax.f32 %v707, 0.0
        %v740 = vmax.f32 %v708, 0.0
        %v741 = vmax.f32 %v709, 0.0
        %v742 = vmax.f32 %v710, 0.0
        %v743 = vmax.f32 %v711, 0.0
        %v744 = vmax.f32 %v712, 0.0
        %v745 = vmax.f32 %v713, 0.0
        %v746 = vmax.f32 %v714, 0.0
        %v747 = vmax.f32 %v715, 0.0
        %v748 = vmax.f32 %v716, 0.0
        %v749 = vmax.f32 %v717, 0.0
        %v750 = vmax.f32 %v718, 0.0
        %v751 = vmax.f32 %v719, 0.0
        %v752 = vmax.f32 %v720, 0.0
        %v753 = vmax.f32 %v721, 0.0
        %v754 = vmax.f32 %v722, 0.0
        %v755 = vmax.f32 %v723, 0.0
        %v756 = vmax.f32 %v724, 0.0
        %v757 = vmax.f32 %v725, 0.0
        %v758 = vmax.f32 %v726, 0.0
        %v759 = vmax.f32 %v727, 0.0
        %v760 = vmax.f32 %v728, 0.0
        %v761 = vmax.f32 %v729, 0.0
        %v762 = vmax.f32 %v730, 0.0
        %vm763 = vcmask 48128
        %764 = vst.msk [vmem:[#allocation2] sm:$0xff] %vm763, 0.0
        %765 = vst.msk [vmem:[#allocation2 + $0x8] sm:$0xff] %vm763, 0.0
        %766 = vst.msk [vmem:[#allocation2 + $0x10] sm:$0xff] %vm763, 0.0
        %767 = vst.msk [vmem:[#allocation2 + $0x18] sm:$0xff] %vm763, 0.0
        %768 = vst.msk [vmem:[#allocation2 + $0x20] sm:$0xff] %vm763, 0.0
        %769 = vst.msk [vmem:[#allocation2 + $0x28] sm:$0xff] %vm763, 0.0
        %770 = vst.msk [vmem:[#allocation2 + $0x30] sm:$0xff] %vm763, 0.0
        %771 = vst.msk [vmem:[#allocation2 + $0x38] sm:$0xff] %vm763, 0.0
        %772 = vst.msk [vmem:[#allocation2 + $0x40] sm:$0xff] %vm763, 0.0
        %773 = vst.msk [vmem:[#allocation2 + $0x48] sm:$0xff] %vm763, 0.0
        %774 = vst.msk [vmem:[#allocation2 + $0x50] sm:$0xff] %vm763, 0.0
        %775 = vst.msk [vmem:[#allocation2 + $0x58] sm:$0xff] %vm763, 0.0
        %776 = vst.msk [vmem:[#allocation2 + $0x60] sm:$0xff] %vm763, 0.0
        %777 = vst.msk [vmem:[#allocation2 + $0x68] sm:$0xff] %vm763, 0.0
        %778 = vst.msk [vmem:[#allocation2 + $0x70] sm:$0xff] %vm763, 0.0
        %779 = vst.msk [vmem:[#allocation2 + $0x78] sm:$0xff] %vm763, 0.0
        %780 = vst.msk [vmem:[#allocation2 + $0x80] sm:$0xff] %vm763, 0.0
        %781 = vst.msk [vmem:[#allocation2 + $0x88] sm:$0xff] %vm763, 0.0
        %782 = vst.msk [vmem:[#allocation2 + $0x90] sm:$0xff] %vm763, 0.0
        %783 = vst.msk [vmem:[#allocation2 + $0x98] sm:$0xff] %vm763, 0.0
        %784 = vst.msk [vmem:[#allocation2 + $0xa0] sm:$0xff] %vm763, 0.0
        %785 = vst.msk [vmem:[#allocation2 + $0xa8] sm:$0xff] %vm763, 0.0
        %786 = vst.msk [vmem:[#allocation2 + $0xb0] sm:$0xff] %vm763, 0.0
        %787 = vst.msk [vmem:[#allocation2 + $0xb8] sm:$0xff] %vm763, 0.0
        %788 = vst.msk [vmem:[#allocation2 + $0xc0] sm:$0xff] %vm763, 0.0
        %789 = vst.msk [vmem:[#allocation2 + $0xc8] sm:$0xff] %vm763, 0.0
        %790 = vst.msk [vmem:[#allocation2 + $0xd0] sm:$0xff] %vm763, 0.0
        %791 = vst.msk [vmem:[#allocation2 + $0xd8] sm:$0xff] %vm763, 0.0
        %792 = vst.msk [vmem:[#allocation2 + $0xe0] sm:$0xff] %vm763, 0.0
        %793 = vst.msk [vmem:[#allocation2 + $0xe8] sm:$0xff] %vm763, 0.0
        %794 = vst.msk [vmem:[#allocation2 + $0xf0] sm:$0xff] %vm763, 0.0
        %795 = vst.msk [vmem:[#allocation2 + $0xf8] sm:$0xff] %vm763, 0.0
        %796 = vst.msk [vmem:[#allocation2 + $0x100] sm:$0xff] %vm763, 0.0
        %797 = vst.msk [vmem:[#allocation2 + $0x108] sm:$0xff] %vm763, 0.0
        %798 = vst.msk [vmem:[#allocation2 + $0x110] sm:$0xff] %vm763, 0.0
        %799 = vst.msk [vmem:[#allocation2 + $0x118] sm:$0xff] %vm763, 0.0
        %800 = vst.msk [vmem:[#allocation2 + $0x120] sm:$0xff] %vm763, 0.0
        %801 = vst.msk [vmem:[#allocation2 + $0x128] sm:$0xff] %vm763, 0.0
        %802 = vst.msk [vmem:[#allocation2 + $0x130] sm:$0xff] %vm763, 0.0
        %803 = vst.msk [vmem:[#allocation2 + $0x138] sm:$0xff] %vm763, 0.0
        %804 = vst.msk [vmem:[#allocation2 + $0x140] sm:$0xff] %vm763, 0.0
        %805 = vst.msk [vmem:[#allocation2 + $0x148] sm:$0xff] %vm763, 0.0
        %806 = vst.msk [vmem:[#allocation2 + $0x150] sm:$0xff] %vm763, 0.0
        %807 = vst.msk [vmem:[#allocation2 + $0x158] sm:$0xff] %vm763, 0.0
        %808 = vst.msk [vmem:[#allocation2 + $0x160] sm:$0xff] %vm763, 0.0
        %809 = vst.msk [vmem:[#allocation2 + $0x168] sm:$0xff] %vm763, 0.0
        %810 = vst.msk [vmem:[#allocation2 + $0x170] sm:$0xff] %vm763, 0.0
        %811 = vst.msk [vmem:[#allocation2 + $0x178] sm:$0xff] %vm763, 0.0
        %812 = vst.msk [vmem:[#allocation2 + $0x180] sm:$0xff] %vm763, 0.0
        %813 = vst.msk [vmem:[#allocation2 + $0x188] sm:$0xff] %vm763, 0.0
        %814 = vst.msk [vmem:[#allocation2 + $0x190] sm:$0xff] %vm763, 0.0
        %815 = vst.msk [vmem:[#allocation2 + $0x198] sm:$0xff] %vm763, 0.0
        %816 = vst.msk [vmem:[#allocation2 + $0x1a0] sm:$0xff] %vm763, 0.0
        %817 = vst.msk [vmem:[#allocation2 + $0x1a8] sm:$0xff] %vm763, 0.0
        %818 = vst.msk [vmem:[#allocation2 + $0x1b0] sm:$0xff] %vm763, 0.0
        %819 = vst.msk [vmem:[#allocation2 + $0x1b8] sm:$0xff] %vm763, 0.0
        %820 = vst.msk [vmem:[#allocation2 + $0x1c0] sm:$0xff] %vm763, 0.0
        %821 = vst.msk [vmem:[#allocation2 + $0x1c8] sm:$0xff] %vm763, 0.0
        %822 = vst.msk [vmem:[#allocation2 + $0x1d0] sm:$0xff] %vm763, 0.0
        %823 = vst.msk [vmem:[#allocation2 + $0x1d8] sm:$0xff] %vm763, 0.0
        %824 = vst.msk [vmem:[#allocation2 + $0x1e0] sm:$0xff] %vm763, 0.0
        %825 = vst.msk [vmem:[#allocation2 + $0x1e8] sm:$0xff] %vm763, 0.0
        %826 = vst.msk [vmem:[#allocation2 + $0x1f0] sm:$0xff] %vm763, 0.0
        %827 = vst.msk [vmem:[#allocation2 + $0x1f8] sm:$0xff] %vm763, 0.0
        %828 = vst.msk [vmem:[#allocation2 + $0x200] sm:$0xff] %vm763, 0.0
        %829 = vst.msk [vmem:[#allocation2 + $0x208] sm:$0xff] %vm763, 0.0
        %830 = vst.msk [vmem:[#allocation2 + $0x210] sm:$0xff] %vm763, 0.0
        %831 = vst.msk [vmem:[#allocation2 + $0x218] sm:$0xff] %vm763, 0.0
        %832 = vst.msk [vmem:[#allocation2 + $0x220] sm:$0xff] %vm763, 0.0
        %833 = vst.msk [vmem:[#allocation2 + $0x228] sm:$0xff] %vm763, 0.0
        %834 = vst.msk [vmem:[#allocation2 + $0x230] sm:$0xff] %vm763, 0.0
        %835 = vst.msk [vmem:[#allocation2 + $0x238] sm:$0xff] %vm763, 0.0
        %s836 = scalar_lea.vmem [#allocation2], 32
        %837 = vst.msk [vmem:[%s836 + $0x8] sm:$0xff] %vm763, %v731
        %838 = vst.msk [vmem:[%s836 + $0x10] sm:$0xff] %vm763, %v732
        %839 = vst.msk [vmem:[%s836 + $0x28] sm:$0xff] %vm763, %v733
        %840 = vst.msk [vmem:[%s836 + $0x30] sm:$0xff] %vm763, %v734
        %841 = vst.msk [vmem:[%s836 + $0x48] sm:$0xff] %vm763, %v735
        %842 = vst.msk [vmem:[%s836 + $0x50] sm:$0xff] %vm763, %v736
        %843 = vst.msk [vmem:[%s836 + $0x68] sm:$0xff] %vm763, %v737
        %844 = vst.msk [vmem:[%s836 + $0x70] sm:$0xff] %vm763, %v738
        %845 = vst.msk [vmem:[%s836 + $0x88] sm:$0xff] %vm763, %v739
        %846 = vst.msk [vmem:[%s836 + $0x90] sm:$0xff] %vm763, %v740
        %847 = vst.msk [vmem:[%s836 + $0xa8] sm:$0xff] %vm763, %v741
        %848 = vst.msk [vmem:[%s836 + $0xb0] sm:$0xff] %vm763, %v742
        %849 = vst.msk [vmem:[%s836 + $0xc8] sm:$0xff] %vm763, %v743
        %850 = vst.msk [vmem:[%s836 + $0xd0] sm:$0xff] %vm763, %v744
        %851 = vst.msk [vmem:[%s836 + $0xe8] sm:$0xff] %vm763, %v745
        %852 = vst.msk [vmem:[%s836 + $0xf0] sm:$0xff] %vm763, %v746
        %853 = vst.msk [vmem:[%s836 + $0x108] sm:$0xff] %vm763, %v747
        %854 = vst.msk [vmem:[%s836 + $0x110] sm:$0xff] %vm763, %v748
        %855 = vst.msk [vmem:[%s836 + $0x128] sm:$0xff] %vm763, %v749
        %856 = vst.msk [vmem:[%s836 + $0x130] sm:$0xff] %vm763, %v750
        %857 = vst.msk [vmem:[%s836 + $0x148] sm:$0xff] %vm763, %v751
        %858 = vst.msk [vmem:[%s836 + $0x150] sm:$0xff] %vm763, %v752
        %859 = vst.msk [vmem:[%s836 + $0x168] sm:$0xff] %vm763, %v753
        %860 = vst.msk [vmem:[%s836 + $0x170] sm:$0xff] %vm763, %v754
        %861 = vst.msk [vmem:[%s836 + $0x188] sm:$0xff] %vm763, %v755
        %862 = vst.msk [vmem:[%s836 + $0x190] sm:$0xff] %vm763, %v756
        %863 = vst.msk [vmem:[%s836 + $0x1a8] sm:$0xff] %vm763, %v757
        %864 = vst.msk [vmem:[%s836 + $0x1b0] sm:$0xff] %vm763, %v758
        %865 = vst.msk [vmem:[%s836 + $0x1c8] sm:$0xff] %vm763, %v759
        %866 = vst.msk [vmem:[%s836 + $0x1d0] sm:$0xff] %vm763, %v760
        %867 = vst.msk [vmem:[%s836 + $0x1e8] sm:$0xff] %vm763, %v761
        %868 = vst.msk [vmem:[%s836 + $0x1f0] sm:$0xff] %vm763, %v762
        %v869 = vld [vmem:[#allocation2 + $0x7] sm:$0xff]
        %v870 = vld [vmem:[#allocation2 + $0xf] sm:$0xff]
        %v871 = vld [vmem:[#allocation2 + $0x27] sm:$0xff]
        %v872 = vld [vmem:[#allocation2 + $0x2f] sm:$0xff]
        %v873 = vld [vmem:[#allocation2 + $0x47] sm:$0xff]
        %v874 = vld [vmem:[#allocation2 + $0x4f] sm:$0xff]
        %v875 = vld [vmem:[#allocation2 + $0x67] sm:$0xff]
        %v876 = vld [vmem:[#allocation2 + $0x6f] sm:$0xff]
        %v877 = vld [vmem:[#allocation2 + $0x87] sm:$0xff]
        %v878 = vld [vmem:[#allocation2 + $0x8f] sm:$0xff]
        %v879 = vld [vmem:[#allocation2 + $0xa7] sm:$0xff]
        %v880 = vld [vmem:[#allocation2 + $0xaf] sm:$0xff]
        %v881 = vld [vmem:[#allocation2 + $0xc7] sm:$0xff]
        %v882 = vld [vmem:[#allocation2 + $0xcf] sm:$0xff]
        %v883 = vld [vmem:[#allocation2 + $0xe7] sm:$0xff]
        %v884 = vld [vmem:[#allocation2 + $0xef] sm:$0xff]
        %v885 = vld [vmem:[#allocation2 + $0x107] sm:$0xff]
        %v886 = vld [vmem:[#allocation2 + $0x10f] sm:$0xff]
        %v887 = vld [vmem:[#allocation2 + $0x127] sm:$0xff]
        %v888 = vld [vmem:[#allocation2 + $0x12f] sm:$0xff]
        %v889 = vld [vmem:[#allocation2 + $0x147] sm:$0xff]
        %v890 = vld [vmem:[#allocation2 + $0x14f] sm:$0xff]
        %v891 = vld [vmem:[#allocation2 + $0x167] sm:$0xff]
        %v892 = vld [vmem:[#allocation2 + $0x16f] sm:$0xff]
        %v893 = vld [vmem:[#allocation2 + $0x187] sm:$0xff]
        %v894 = vld [vmem:[#allocation2 + $0x18f] sm:$0xff]
        %v895 = vld [vmem:[#allocation2 + $0x1a7] sm:$0xff]
        %v896 = vld [vmem:[#allocation2 + $0x1af] sm:$0xff]
        %v897 = vld [vmem:[#allocation2 + $0x1c7] sm:$0xff]
        %v898 = vld [vmem:[#allocation2 + $0x1cf] sm:$0xff]
        %v899 = vld [vmem:[#allocation2 + $0x1e7] sm:$0xff]
        %v900 = vld [vmem:[#allocation2 + $0x1ef] sm:$0xff]
        %v901 = vld [vmem:[%s4] sm:$0x1]
        %v902 = vlaneseq
        %v903 = vshrl.u32 %v902, 7
        %v904 = vsub.s32 0, %v903
        %v905 = vrot.slane %v901, %v904
        %v906 = vmul.f32 %v869, %v905
        %v907 = vmul.f32 %v870, %v905
        %v908 = vmul.f32 %v871, %v905
        %v909 = vmul.f32 %v872, %v905
        %v910 = vmul.f32 %v873, %v905
        %v911 = vmul.f32 %v874, %v905
        %v912 = vmul.f32 %v875, %v905
        %v913 = vmul.f32 %v876, %v905
        %v914 = vmul.f32 %v877, %v905
        %v915 = vmul.f32 %v878, %v905
        %v916 = vmul.f32 %v879, %v905
        %v917 = vmul.f32 %v880, %v905
        %v918 = vmul.f32 %v881, %v905
        %v919 = vmul.f32 %v882, %v905
        %v920 = vmul.f32 %v883, %v905
        %v921 = vmul.f32 %v884, %v905
        %v922 = vmul.f32 %v885, %v905
        %v923 = vmul.f32 %v886, %v905
        %v924 = vmul.f32 %v887, %v905
        %v925 = vmul.f32 %v888, %v905
        %v926 = vmul.f32 %v889, %v905
        %v927 = vmul.f32 %v890, %v905
        %v928 = vmul.f32 %v891, %v905
        %v929 = vmul.f32 %v892, %v905
        %v930 = vmul.f32 %v893, %v905
        %v931 = vmul.f32 %v894, %v905
        %v932 = vmul.f32 %v895, %v905
        %v933 = vmul.f32 %v896, %v905
        %v934 = vmul.f32 %v897, %v905
        %v935 = vmul.f32 %v898, %v905
        %v936 = vmul.f32 %v899, %v905
        %v937 = vmul.f32 %v900, %v905
        %v938 = vadd.f32 %v906, 0.0
        %v939 = vadd.f32 %v907, 0.0
        %v940 = vadd.f32 %v908, 0.0
        %v941 = vadd.f32 %v909, 0.0
        %v942 = vadd.f32 %v910, 0.0
        %v943 = vadd.f32 %v911, 0.0
        %v944 = vadd.f32 %v912, 0.0
        %v945 = vadd.f32 %v913, 0.0
        %v946 = vadd.f32 %v914, 0.0
        %v947 = vadd.f32 %v915, 0.0
        %v948 = vadd.f32 %v916, 0.0
        %v949 = vadd.f32 %v917, 0.0
        %v950 = vadd.f32 %v918, 0.0
        %v951 = vadd.f32 %v919, 0.0
        %v952 = vadd.f32 %v920, 0.0
        %v953 = vadd.f32 %v921, 0.0
        %v954 = vadd.f32 %v922, 0.0
        %v955 = vadd.f32 %v923, 0.0
        %v956 = vadd.f32 %v924, 0.0
        %v957 = vadd.f32 %v925, 0.0
        %v958 = vadd.f32 %v926, 0.0
        %v959 = vadd.f32 %v927, 0.0
        %v960 = vadd.f32 %v928, 0.0
        %v961 = vadd.f32 %v929, 0.0
        %v962 = vadd.f32 %v930, 0.0
        %v963 = vadd.f32 %v931, 0.0
        %v964 = vadd.f32 %v932, 0.0
        %v965 = vadd.f32 %v933, 0.0
        %v966 = vadd.f32 %v934, 0.0
        %v967 = vadd.f32 %v935, 0.0
        %v968 = vadd.f32 %v936, 0.0
        %v969 = vadd.f32 %v937, 0.0
        %v970 = vld [vmem:[#allocation2 + $0x8] sm:$0xff]
        %v971 = vld [vmem:[#allocation2 + $0x10] sm:$0xff]
        %v972 = vld [vmem:[#allocation2 + $0x28] sm:$0xff]
        %v973 = vld [vmem:[#allocation2 + $0x30] sm:$0xff]
        %v974 = vld [vmem:[#allocation2 + $0x48] sm:$0xff]
        %v975 = vld [vmem:[#allocation2 + $0x50] sm:$0xff]
        %v976 = vld [vmem:[#allocation2 + $0x68] sm:$0xff]
        %v977 = vld [vmem:[#allocation2 + $0x70] sm:$0xff]
        %v978 = vld [vmem:[#allocation2 + $0x88] sm:$0xff]
        %v979 = vld [vmem:[#allocation2 + $0x90] sm:$0xff]
        %v980 = vld [vmem:[#allocation2 + $0xa8] sm:$0xff]
        %v981 = vld [vmem:[#allocation2 + $0xb0] sm:$0xff]
        %v982 = vld [vmem:[#allocation2 + $0xc8] sm:$0xff]
        %v983 = vld [vmem:[#allocation2 + $0xd0] sm:$0xff]
        %v984 = vld [vmem:[#allocation2 + $0xe8] sm:$0xff]
        %v985 = vld [vmem:[#allocation2 + $0xf0] sm:$0xff]
        %v986 = vld [vmem:[#allocation2 + $0x108] sm:$0xff]
        %v987 = vld [vmem:[#allocation2 + $0x110] sm:$0xff]
        %v988 = vld [vmem:[#allocation2 + $0x128] sm:$0xff]
        %v989 = vld [vmem:[#allocation2 + $0x130] sm:$0xff]
        %v990 = vld [vmem:[#allocation2 + $0x148] sm:$0xff]
        %v991 = vld [vmem:[#allocation2 + $0x150] sm:$0xff]
        %v992 = vld [vmem:[#allocation2 + $0x168] sm:$0xff]
        %v993 = vld [vmem:[#allocation2 + $0x170] sm:$0xff]
        %v994 = vld [vmem:[#allocation2 + $0x188] sm:$0xff]
        %v995 = vld [vmem:[#allocation2 + $0x190] sm:$0xff]
        %v996 = vld [vmem:[#allocation2 + $0x1a8] sm:$0xff]
        %v997 = vld [vmem:[#allocation2 + $0x1b0] sm:$0xff]
        %v998 = vld [vmem:[#allocation2 + $0x1c8] sm:$0xff]
        %v999 = vld [vmem:[#allocation2 + $0x1d0] sm:$0xff]
        %v1000 = vld [vmem:[#allocation2 + $0x1e8] sm:$0xff]
        %v1001 = vld [vmem:[#allocation2 + $0x1f0] sm:$0xff]
        %v1002 = vld [vmem:[%s4 + $0x1] sm:$0x1]
        %v1003 = vlaneseq
        %v1004 = vshrl.u32 %v1003, 7
        %v1005 = vsub.s32 0, %v1004
        %v1006 = vrot.slane %v1002, %v1005
        %v1007 = vmul.f32 %v970, %v1006
        %v1008 = vmul.f32 %v971, %v1006
        %v1009 = vmul.f32 %v972, %v1006
        %v1010 = vmul.f32 %v973, %v1006
        %v1011 = vmul.f32 %v974, %v1006
        %v1012 = vmul.f32 %v975, %v1006
        %v1013 = vmul.f32 %v976, %v1006
        %v1014 = vmul.f32 %v977, %v1006
        %v1015 = vmul.f32 %v978, %v1006
        %v1016 = vmul.f32 %v979, %v1006
        %v1017 = vmul.f32 %v980, %v1006
        %v1018 = vmul.f32 %v981, %v1006
        %v1019 = vmul.f32 %v982, %v1006
        %v1020 = vmul.f32 %v983, %v1006
        %v1021 = vmul.f32 %v984, %v1006
        %v1022 = vmul.f32 %v985, %v1006
        %v1023 = vmul.f32 %v986, %v1006
        %v1024 = vmul.f32 %v987, %v1006
        %v1025 = vmul.f32 %v988, %v1006
        %v1026 = vmul.f32 %v989, %v1006
        %v1027 = vmul.f32 %v990, %v1006
        %v1028 = vmul.f32 %v991, %v1006
        %v1029 = vmul.f32 %v992, %v1006
        %v1030 = vmul.f32 %v993, %v1006
        %v1031 = vmul.f32 %v994, %v1006
        %v1032 = vmul.f32 %v995, %v1006
        %v1033 = vmul.f32 %v996, %v1006
        %v1034 = vmul.f32 %v997, %v1006
        %v1035 = vmul.f32 %v998, %v1006
        %v1036 = vmul.f32 %v999, %v1006
        %v1037 = vmul.f32 %v1000, %v1006
        %v1038 = vmul.f32 %v1001, %v1006
        %v1039 = vadd.f32 %v938, %v1007
        %v1040 = vadd.f32 %v939, %v1008
        %v1041 = vadd.f32 %v940, %v1009
        %v1042 = vadd.f32 %v941, %v1010
        %v1043 = vadd.f32 %v942, %v1011
        %v1044 = vadd.f32 %v943, %v1012
        %v1045 = vadd.f32 %v944, %v1013
        %v1046 = vadd.f32 %v945, %v1014
        %v1047 = vadd.f32 %v946, %v1015
        %v1048 = vadd.f32 %v947, %v1016
        %v1049 = vadd.f32 %v948, %v1017
        %v1050 = vadd.f32 %v949, %v1018
        %v1051 = vadd.f32 %v950, %v1019
        %v1052 = vadd.f32 %v951, %v1020
        %v1053 = vadd.f32 %v952, %v1021
        %v1054 = vadd.f32 %v953, %v1022
        %v1055 = vadd.f32 %v954, %v1023
        %v1056 = vadd.f32 %v955, %v1024
        %v1057 = vadd.f32 %v956, %v1025
        %v1058 = vadd.f32 %v957, %v1026
        %v1059 = vadd.f32 %v958, %v1027
        %v1060 = vadd.f32 %v959, %v1028
        %v1061 = vadd.f32 %v960, %v1029
        %v1062 = vadd.f32 %v961, %v1030
        %v1063 = vadd.f32 %v962, %v1031
        %v1064 = vadd.f32 %v963, %v1032
        %v1065 = vadd.f32 %v964, %v1033
        %v1066 = vadd.f32 %v965, %v1034
        %v1067 = vadd.f32 %v966, %v1035
        %v1068 = vadd.f32 %v967, %v1036
        %v1069 = vadd.f32 %v968, %v1037
        %v1070 = vadd.f32 %v969, %v1038
        %v1071 = vld [vmem:[#allocation2 + $0x9] sm:$0xff]
        %v1072 = vld [vmem:[#allocation2 + $0x11] sm:$0xff]
        %v1073 = vld [vmem:[#allocation2 + $0x29] sm:$0xff]
        %v1074 = vld [vmem:[#allocation2 + $0x31] sm:$0xff]
        %v1075 = vld [vmem:[#allocation2 + $0x49] sm:$0xff]
        %v1076 = vld [vmem:[#allocation2 + $0x51] sm:$0xff]
        %v1077 = vld [vmem:[#allocation2 + $0x69] sm:$0xff]
        %v1078 = vld [vmem:[#allocation2 + $0x71] sm:$0xff]
        %v1079 = vld [vmem:[#allocation2 + $0x89] sm:$0xff]
        %v1080 = vld [vmem:[#allocation2 + $0x91] sm:$0xff]
        %v1081 = vld [vmem:[#allocation2 + $0xa9] sm:$0xff]
        %v1082 = vld [vmem:[#allocation2 + $0xb1] sm:$0xff]
        %v1083 = vld [vmem:[#allocation2 + $0xc9] sm:$0xff]
        %v1084 = vld [vmem:[#allocation2 + $0xd1] sm:$0xff]
        %v1085 = vld [vmem:[#allocation2 + $0xe9] sm:$0xff]
        %v1086 = vld [vmem:[#allocation2 + $0xf1] sm:$0xff]
        %v1087 = vld [vmem:[#allocation2 + $0x109] sm:$0xff]
        %v1088 = vld [vmem:[#allocation2 + $0x111] sm:$0xff]
        %v1089 = vld [vmem:[#allocation2 + $0x129] sm:$0xff]
        %v1090 = vld [vmem:[#allocation2 + $0x131] sm:$0xff]
        %v1091 = vld [vmem:[#allocation2 + $0x149] sm:$0xff]
        %v1092 = vld [vmem:[#allocation2 + $0x151] sm:$0xff]
        %v1093 = vld [vmem:[#allocation2 + $0x169] sm:$0xff]
        %v1094 = vld [vmem:[#allocation2 + $0x171] sm:$0xff]
        %v1095 = vld [vmem:[#allocation2 + $0x189] sm:$0xff]
        %v1096 = vld [vmem:[#allocation2 + $0x191] sm:$0xff]
        %v1097 = vld [vmem:[#allocation2 + $0x1a9] sm:$0xff]
        %v1098 = vld [vmem:[#allocation2 + $0x1b1] sm:$0xff]
        %v1099 = vld [vmem:[#allocation2 + $0x1c9] sm:$0xff]
        %v1100 = vld [vmem:[#allocation2 + $0x1d1] sm:$0xff]
        %v1101 = vld [vmem:[#allocation2 + $0x1e9] sm:$0xff]
        %v1102 = vld [vmem:[#allocation2 + $0x1f1] sm:$0xff]
        %v1103 = vld [vmem:[%s4 + $0x2] sm:$0x1]
        %v1104 = vlaneseq
        %v1105 = vshrl.u32 %v1104, 7
        %v1106 = vsub.s32 0, %v1105
        %v1107 = vrot.slane %v1103, %v1106
        %v1108 = vmul.f32 %v1071, %v1107
        %v1109 = vmul.f32 %v1072, %v1107
        %v1110 = vmul.f32 %v1073, %v1107
        %v1111 = vmul.f32 %v1074, %v1107
        %v1112 = vmul.f32 %v1075, %v1107
        %v1113 = vmul.f32 %v1076, %v1107
        %v1114 = vmul.f32 %v1077, %v1107
        %v1115 = vmul.f32 %v1078, %v1107
        %v1116 = vmul.f32 %v1079, %v1107
        %v1117 = vmul.f32 %v1080, %v1107
        %v1118 = vmul.f32 %v1081, %v1107
        %v1119 = vmul.f32 %v1082, %v1107
        %v1120 = vmul.f32 %v1083, %v1107
        %v1121 = vmul.f32 %v1084, %v1107
        %v1122 = vmul.f32 %v1085, %v1107
        %v1123 = vmul.f32 %v1086, %v1107
        %v1124 = vmul.f32 %v1087, %v1107
        %v1125 = vmul.f32 %v1088, %v1107
        %v1126 = vmul.f32 %v1089, %v1107
        %v1127 = vmul.f32 %v1090, %v1107
        %v1128 = vmul.f32 %v1091, %v1107
        %v1129 = vmul.f32 %v1092, %v1107
        %v1130 = vmul.f32 %v1093, %v1107
        %v1131 = vmul.f32 %v1094, %v1107
        %v1132 = vmul.f32 %v1095, %v1107
        %v1133 = vmul.f32 %v1096, %v1107
        %v1134 = vmul.f32 %v1097, %v1107
        %v1135 = vmul.f32 %v1098, %v1107
        %v1136 = vmul.f32 %v1099, %v1107
        %v1137 = vmul.f32 %v1100, %v1107
        %v1138 = vmul.f32 %v1101, %v1107
        %v1139 = vmul.f32 %v1102, %v1107
        %v1140 = vadd.f32 %v1039, %v1108
        %v1141 = vadd.f32 %v1040, %v1109
        %v1142 = vadd.f32 %v1041, %v1110
        %v1143 = vadd.f32 %v1042, %v1111
        %v1144 = vadd.f32 %v1043, %v1112
        %v1145 = vadd.f32 %v1044, %v1113
        %v1146 = vadd.f32 %v1045, %v1114
        %v1147 = vadd.f32 %v1046, %v1115
        %v1148 = vadd.f32 %v1047, %v1116
        %v1149 = vadd.f32 %v1048, %v1117
        %v1150 = vadd.f32 %v1049, %v1118
        %v1151 = vadd.f32 %v1050, %v1119
        %v1152 = vadd.f32 %v1051, %v1120
        %v1153 = vadd.f32 %v1052, %v1121
        %v1154 = vadd.f32 %v1053, %v1122
        %v1155 = vadd.f32 %v1054, %v1123
        %v1156 = vadd.f32 %v1055, %v1124
        %v1157 = vadd.f32 %v1056, %v1125
        %v1158 = vadd.f32 %v1057, %v1126
        %v1159 = vadd.f32 %v1058, %v1127
        %v1160 = vadd.f32 %v1059, %v1128
        %v1161 = vadd.f32 %v1060, %v1129
        %v1162 = vadd.f32 %v1061, %v1130
        %v1163 = vadd.f32 %v1062, %v1131
        %v1164 = vadd.f32 %v1063, %v1132
        %v1165 = vadd.f32 %v1064, %v1133
        %v1166 = vadd.f32 %v1065, %v1134
        %v1167 = vadd.f32 %v1066, %v1135
        %v1168 = vadd.f32 %v1067, %v1136
        %v1169 = vadd.f32 %v1068, %v1137
        %v1170 = vadd.f32 %v1069, %v1138
        %v1171 = vadd.f32 %v1070, %v1139
        %v1172 = vld [vmem:[%s836 + $0x7] sm:$0xff]
        %v1173 = vld [vmem:[%s836 + $0xf] sm:$0xff]
        %v1174 = vld [vmem:[%s836 + $0x27] sm:$0xff]
        %v1175 = vld [vmem:[%s836 + $0x2f] sm:$0xff]
        %v1176 = vld [vmem:[%s836 + $0x47] sm:$0xff]
        %v1177 = vld [vmem:[%s836 + $0x4f] sm:$0xff]
        %v1178 = vld [vmem:[%s836 + $0x67] sm:$0xff]
        %v1179 = vld [vmem:[%s836 + $0x6f] sm:$0xff]
        %v1180 = vld [vmem:[%s836 + $0x87] sm:$0xff]
        %v1181 = vld [vmem:[%s836 + $0x8f] sm:$0xff]
        %v1182 = vld [vmem:[%s836 + $0xa7] sm:$0xff]
        %v1183 = vld [vmem:[%s836 + $0xaf] sm:$0xff]
        %v1184 = vld [vmem:[%s836 + $0xc7] sm:$0xff]
        %v1185 = vld [vmem:[%s836 + $0xcf] sm:$0xff]
        %v1186 = vld [vmem:[%s836 + $0xe7] sm:$0xff]
        %v1187 = vld [vmem:[%s836 + $0xef] sm:$0xff]
        %v1188 = vld [vmem:[%s836 + $0x107] sm:$0xff]
        %v1189 = vld [vmem:[%s836 + $0x10f] sm:$0xff]
        %v1190 = vld [vmem:[%s836 + $0x127] sm:$0xff]
        %v1191 = vld [vmem:[%s836 + $0x12f] sm:$0xff]
        %v1192 = vld [vmem:[%s836 + $0x147] sm:$0xff]
        %v1193 = vld [vmem:[%s836 + $0x14f] sm:$0xff]
        %v1194 = vld [vmem:[%s836 + $0x167] sm:$0xff]
        %v1195 = vld [vmem:[%s836 + $0x16f] sm:$0xff]
        %v1196 = vld [vmem:[%s836 + $0x187] sm:$0xff]
        %v1197 = vld [vmem:[%s836 + $0x18f] sm:$0xff]
        %v1198 = vld [vmem:[%s836 + $0x1a7] sm:$0xff]
        %v1199 = vld [vmem:[%s836 + $0x1af] sm:$0xff]
        %v1200 = vld [vmem:[%s836 + $0x1c7] sm:$0xff]
        %v1201 = vld [vmem:[%s836 + $0x1cf] sm:$0xff]
        %v1202 = vld [vmem:[%s836 + $0x1e7] sm:$0xff]
        %v1203 = vld [vmem:[%s836 + $0x1ef] sm:$0xff]
        %v1204 = vld [vmem:[%s4 + $0x3] sm:$0x1]
        %v1205 = vlaneseq
        %v1206 = vshrl.u32 %v1205, 7
        %v1207 = vsub.s32 0, %v1206
        %v1208 = vrot.slane %v1204, %v1207
        %v1209 = vmul.f32 %v1172, %v1208
        %v1210 = vmul.f32 %v1173, %v1208
        %v1211 = vmul.f32 %v1174, %v1208
        %v1212 = vmul.f32 %v1175, %v1208
        %v1213 = vmul.f32 %v1176, %v1208
        %v1214 = vmul.f32 %v1177, %v1208
        %v1215 = vmul.f32 %v1178, %v1208
        %v1216 = vmul.f32 %v1179, %v1208
        %v1217 = vmul.f32 %v1180, %v1208
        %v1218 = vmul.f32 %v1181, %v1208
        %v1219 = vmul.f32 %v1182, %v1208
        %v1220 = vmul.f32 %v1183, %v1208
        %v1221 = vmul.f32 %v1184, %v1208
        %v1222 = vmul.f32 %v1185, %v1208
        %v1223 = vmul.f32 %v1186, %v1208
        %v1224 = vmul.f32 %v1187, %v1208
        %v1225 = vmul.f32 %v1188, %v1208
        %v1226 = vmul.f32 %v1189, %v1208
        %v1227 = vmul.f32 %v1190, %v1208
        %v1228 = vmul.f32 %v1191, %v1208
        %v1229 = vmul.f32 %v1192, %v1208
        %v1230 = vmul.f32 %v1193, %v1208
        %v1231 = vmul.f32 %v1194, %v1208
        %v1232 = vmul.f32 %v1195, %v1208
        %v1233 = vmul.f32 %v1196, %v1208
        %v1234 = vmul.f32 %v1197, %v1208
        %v1235 = vmul.f32 %v1198, %v1208
        %v1236 = vmul.f32 %v1199, %v1208
        %v1237 = vmul.f32 %v1200, %v1208
        %v1238 = vmul.f32 %v1201, %v1208
        %v1239 = vmul.f32 %v1202, %v1208
        %v1240 = vmul.f32 %v1203, %v1208
        %v1241 = vadd.f32 %v1140, %v1209
        %v1242 = vadd.f32 %v1141, %v1210
        %v1243 = vadd.f32 %v1142, %v1211
        %v1244 = vadd.f32 %v1143, %v1212
        %v1245 = vadd.f32 %v1144, %v1213
        %v1246 = vadd.f32 %v1145, %v1214
        %v1247 = vadd.f32 %v1146, %v1215
        %v1248 = vadd.f32 %v1147, %v1216
        %v1249 = vadd.f32 %v1148, %v1217
        %v1250 = vadd.f32 %v1149, %v1218
        %v1251 = vadd.f32 %v1150, %v1219
        %v1252 = vadd.f32 %v1151, %v1220
        %v1253 = vadd.f32 %v1152, %v1221
        %v1254 = vadd.f32 %v1153, %v1222
        %v1255 = vadd.f32 %v1154, %v1223
        %v1256 = vadd.f32 %v1155, %v1224
        %v1257 = vadd.f32 %v1156, %v1225
        %v1258 = vadd.f32 %v1157, %v1226
        %v1259 = vadd.f32 %v1158, %v1227
        %v1260 = vadd.f32 %v1159, %v1228
        %v1261 = vadd.f32 %v1160, %v1229
        %v1262 = vadd.f32 %v1161, %v1230
        %v1263 = vadd.f32 %v1162, %v1231
        %v1264 = vadd.f32 %v1163, %v1232
        %v1265 = vadd.f32 %v1164, %v1233
        %v1266 = vadd.f32 %v1165, %v1234
        %v1267 = vadd.f32 %v1166, %v1235
        %v1268 = vadd.f32 %v1167, %v1236
        %v1269 = vadd.f32 %v1168, %v1237
        %v1270 = vadd.f32 %v1169, %v1238
        %v1271 = vadd.f32 %v1170, %v1239
        %v1272 = vadd.f32 %v1171, %v1240
        %v1273 = vld [vmem:[%s836 + $0x8] sm:$0xff]
        %v1274 = vld [vmem:[%s836 + $0x10] sm:$0xff]
        %v1275 = vld [vmem:[%s836 + $0x28] sm:$0xff]
        %v1276 = vld [vmem:[%s836 + $0x30] sm:$0xff]
        %v1277 = vld [vmem:[%s836 + $0x48] sm:$0xff]
        %v1278 = vld [vmem:[%s836 + $0x50] sm:$0xff]
        %v1279 = vld [vmem:[%s836 + $0x68] sm:$0xff]
        %v1280 = vld [vmem:[%s836 + $0x70] sm:$0xff]
        %v1281 = vld [vmem:[%s836 + $0x88] sm:$0xff]
        %v1282 = vld [vmem:[%s836 + $0x90] sm:$0xff]
        %v1283 = vld [vmem:[%s836 + $0xa8] sm:$0xff]
        %v1284 = vld [vmem:[%s836 + $0xb0] sm:$0xff]
        %v1285 = vld [vmem:[%s836 + $0xc8] sm:$0xff]
        %v1286 = vld [vmem:[%s836 + $0xd0] sm:$0xff]
        %v1287 = vld [vmem:[%s836 + $0xe8] sm:$0xff]
        %v1288 = vld [vmem:[%s836 + $0xf0] sm:$0xff]
        %v1289 = vld [vmem:[%s836 + $0x108] sm:$0xff]
        %v1290 = vld [vmem:[%s836 + $0x110] sm:$0xff]
        %v1291 = vld [vmem:[%s836 + $0x128] sm:$0xff]
        %v1292 = vld [vmem:[%s836 + $0x130] sm:$0xff]
        %v1293 = vld [vmem:[%s836 + $0x148] sm:$0xff]
        %v1294 = vld [vmem:[%s836 + $0x150] sm:$0xff]
        %v1295 = vld [vmem:[%s836 + $0x168] sm:$0xff]
        %v1296 = vld [vmem:[%s836 + $0x170] sm:$0xff]
        %v1297 = vld [vmem:[%s836 + $0x188] sm:$0xff]
        %v1298 = vld [vmem:[%s836 + $0x190] sm:$0xff]
        %v1299 = vld [vmem:[%s836 + $0x1a8] sm:$0xff]
        %v1300 = vld [vmem:[%s836 + $0x1b0] sm:$0xff]
        %v1301 = vld [vmem:[%s836 + $0x1c8] sm:$0xff]
        %v1302 = vld [vmem:[%s836 + $0x1d0] sm:$0xff]
        %v1303 = vld [vmem:[%s836 + $0x1e8] sm:$0xff]
        %v1304 = vld [vmem:[%s836 + $0x1f0] sm:$0xff]
        %v1305 = vld [vmem:[%s4 + $0x4] sm:$0x1]
        %v1306 = vlaneseq
        %v1307 = vshrl.u32 %v1306, 7
        %v1308 = vsub.s32 0, %v1307
        %v1309 = vrot.slane %v1305, %v1308
        %v1310 = vmul.f32 %v1273, %v1309
        %v1311 = vmul.f32 %v1274, %v1309
        %v1312 = vmul.f32 %v1275, %v1309
        %v1313 = vmul.f32 %v1276, %v1309
        %v1314 = vmul.f32 %v1277, %v1309
        %v1315 = vmul.f32 %v1278, %v1309
        %v1316 = vmul.f32 %v1279, %v1309
        %v1317 = vmul.f32 %v1280, %v1309
        %v1318 = vmul.f32 %v1281, %v1309
        %v1319 = vmul.f32 %v1282, %v1309
        %v1320 = vmul.f32 %v1283, %v1309
        %v1321 = vmul.f32 %v1284, %v1309
        %v1322 = vmul.f32 %v1285, %v1309
        %v1323 = vmul.f32 %v1286, %v1309
        %v1324 = vmul.f32 %v1287, %v1309
        %v1325 = vmul.f32 %v1288, %v1309
        %v1326 = vmul.f32 %v1289, %v1309
        %v1327 = vmul.f32 %v1290, %v1309
        %v1328 = vmul.f32 %v1291, %v1309
        %v1329 = vmul.f32 %v1292, %v1309
        %v1330 = vmul.f32 %v1293, %v1309
        %v1331 = vmul.f32 %v1294, %v1309
        %v1332 = vmul.f32 %v1295, %v1309
        %v1333 = vmul.f32 %v1296, %v1309
        %v1334 = vmul.f32 %v1297, %v1309
        %v1335 = vmul.f32 %v1298, %v1309
        %v1336 = vmul.f32 %v1299, %v1309
        %v1337 = vmul.f32 %v1300, %v1309
        %v1338 = vmul.f32 %v1301, %v1309
        %v1339 = vmul.f32 %v1302, %v1309
        %v1340 = vmul.f32 %v1303, %v1309
        %v1341 = vmul.f32 %v1304, %v1309
        %v1342 = vadd.f32 %v1241, %v1310
        %v1343 = vadd.f32 %v1242, %v1311
        %v1344 = vadd.f32 %v1243, %v1312
        %v1345 = vadd.f32 %v1244, %v1313
        %v1346 = vadd.f32 %v1245, %v1314
        %v1347 = vadd.f32 %v1246, %v1315
        %v1348 = vadd.f32 %v1247, %v1316
        %v1349 = vadd.f32 %v1248, %v1317
        %v1350 = vadd.f32 %v1249, %v1318
        %v1351 = vadd.f32 %v1250, %v1319
        %v1352 = vadd.f32 %v1251, %v1320
        %v1353 = vadd.f32 %v1252, %v1321
        %v1354 = vadd.f32 %v1253, %v1322
        %v1355 = vadd.f32 %v1254, %v1323
        %v1356 = vadd.f32 %v1255, %v1324
        %v1357 = vadd.f32 %v1256, %v1325
        %v1358 = vadd.f32 %v1257, %v1326
        %v1359 = vadd.f32 %v1258, %v1327
        %v1360 = vadd.f32 %v1259, %v1328
        %v1361 = vadd.f32 %v1260, %v1329
        %v1362 = vadd.f32 %v1261, %v1330
        %v1363 = vadd.f32 %v1262, %v1331
        %v1364 = vadd.f32 %v1263, %v1332
        %v1365 = vadd.f32 %v1264, %v1333
        %v1366 = vadd.f32 %v1265, %v1334
        %v1367 = vadd.f32 %v1266, %v1335
        %v1368 = vadd.f32 %v1267, %v1336
        %v1369 = vadd.f32 %v1268, %v1337
        %v1370 = vadd.f32 %v1269, %v1338
        %v1371 = vadd.f32 %v1270, %v1339
        %v1372 = vadd.f32 %v1271, %v1340
        %v1373 = vadd.f32 %v1272, %v1341
        %v1374 = vld [vmem:[%s836 + $0x9] sm:$0xff]
        %v1375 = vld [vmem:[%s836 + $0x11] sm:$0xff]
        %v1376 = vld [vmem:[%s836 + $0x29] sm:$0xff]
        %v1377 = vld [vmem:[%s836 + $0x31] sm:$0xff]
        %v1378 = vld [vmem:[%s836 + $0x49] sm:$0xff]
        %v1379 = vld [vmem:[%s836 + $0x51] sm:$0xff]
        %v1380 = vld [vmem:[%s836 + $0x69] sm:$0xff]
        %v1381 = vld [vmem:[%s836 + $0x71] sm:$0xff]
        %v1382 = vld [vmem:[%s836 + $0x89] sm:$0xff]
        %v1383 = vld [vmem:[%s836 + $0x91] sm:$0xff]
        %v1384 = vld [vmem:[%s836 + $0xa9] sm:$0xff]
        %v1385 = vld [vmem:[%s836 + $0xb1] sm:$0xff]
        %v1386 = vld [vmem:[%s836 + $0xc9] sm:$0xff]
        %v1387 = vld [vmem:[%s836 + $0xd1] sm:$0xff]
        %v1388 = vld [vmem:[%s836 + $0xe9] sm:$0xff]
        %v1389 = vld [vmem:[%s836 + $0xf1] sm:$0xff]
        %v1390 = vld [vmem:[%s836 + $0x109] sm:$0xff]
        %v1391 = vld [vmem:[%s836 + $0x111] sm:$0xff]
        %v1392 = vld [vmem:[%s836 + $0x129] sm:$0xff]
        %v1393 = vld [vmem:[%s836 + $0x131] sm:$0xff]
        %v1394 = vld [vmem:[%s836 + $0x149] sm:$0xff]
        %v1395 = vld [vmem:[%s836 + $0x151] sm:$0xff]
        %v1396 = vld [vmem:[%s836 + $0x169] sm:$0xff]
        %v1397 = vld [vmem:[%s836 + $0x171] sm:$0xff]
        %v1398 = vld [vmem:[%s836 + $0x189] sm:$0xff]
        %v1399 = vld [vmem:[%s836 + $0x191] sm:$0xff]
        %v1400 = vld [vmem:[%s836 + $0x1a9] sm:$0xff]
        %v1401 = vld [vmem:[%s836 + $0x1b1] sm:$0xff]
        %v1402 = vld [vmem:[%s836 + $0x1c9] sm:$0xff]
        %v1403 = vld [vmem:[%s836 + $0x1d1] sm:$0xff]
        %v1404 = vld [vmem:[%s836 + $0x1e9] sm:$0xff]
        %v1405 = vld [vmem:[%s836 + $0x1f1] sm:$0xff]
        %v1406 = vld [vmem:[%s4 + $0x5] sm:$0x1]
        %v1407 = vlaneseq
        %v1408 = vshrl.u32 %v1407, 7
        %v1409 = vsub.s32 0, %v1408
        %v1410 = vrot.slane %v1406, %v1409
        %v1411 = vmul.f32 %v1374, %v1410
        %v1412 = vmul.f32 %v1375, %v1410
        %v1413 = vmul.f32 %v1376, %v1410
        %v1414 = vmul.f32 %v1377, %v1410
        %v1415 = vmul.f32 %v1378, %v1410
        %v1416 = vmul.f32 %v1379, %v1410
        %v1417 = vmul.f32 %v1380, %v1410
        %v1418 = vmul.f32 %v1381, %v1410
        %v1419 = vmul.f32 %v1382, %v1410
        %v1420 = vmul.f32 %v1383, %v1410
        %v1421 = vmul.f32 %v1384, %v1410
        %v1422 = vmul.f32 %v1385, %v1410
        %v1423 = vmul.f32 %v1386, %v1410
        %v1424 = vmul.f32 %v1387, %v1410
        %v1425 = vmul.f32 %v1388, %v1410
        %v1426 = vmul.f32 %v1389, %v1410
        %v1427 = vmul.f32 %v1390, %v1410
        %v1428 = vmul.f32 %v1391, %v1410
        %v1429 = vmul.f32 %v1392, %v1410
        %v1430 = vmul.f32 %v1393, %v1410
        %v1431 = vmul.f32 %v1394, %v1410
        %v1432 = vmul.f32 %v1395, %v1410
        %v1433 = vmul.f32 %v1396, %v1410
        %v1434 = vmul.f32 %v1397, %v1410
        %v1435 = vmul.f32 %v1398, %v1410
        %v1436 = vmul.f32 %v1399, %v1410
        %v1437 = vmul.f32 %v1400, %v1410
        %v1438 = vmul.f32 %v1401, %v1410
        %v1439 = vmul.f32 %v1402, %v1410
        %v1440 = vmul.f32 %v1403, %v1410
        %v1441 = vmul.f32 %v1404, %v1410
        %v1442 = vmul.f32 %v1405, %v1410
        %v1443 = vadd.f32 %v1342, %v1411
        %v1444 = vadd.f32 %v1343, %v1412
        %v1445 = vadd.f32 %v1344, %v1413
        %v1446 = vadd.f32 %v1345, %v1414
        %v1447 = vadd.f32 %v1346, %v1415
        %v1448 = vadd.f32 %v1347, %v1416
        %v1449 = vadd.f32 %v1348, %v1417
        %v1450 = vadd.f32 %v1349, %v1418
        %v1451 = vadd.f32 %v1350, %v1419
        %v1452 = vadd.f32 %v1351, %v1420
        %v1453 = vadd.f32 %v1352, %v1421
        %v1454 = vadd.f32 %v1353, %v1422
        %v1455 = vadd.f32 %v1354, %v1423
        %v1456 = vadd.f32 %v1355, %v1424
        %v1457 = vadd.f32 %v1356, %v1425
        %v1458 = vadd.f32 %v1357, %v1426
        %v1459 = vadd.f32 %v1358, %v1427
        %v1460 = vadd.f32 %v1359, %v1428
        %v1461 = vadd.f32 %v1360, %v1429
        %v1462 = vadd.f32 %v1361, %v1430
        %v1463 = vadd.f32 %v1362, %v1431
        %v1464 = vadd.f32 %v1363, %v1432
        %v1465 = vadd.f32 %v1364, %v1433
        %v1466 = vadd.f32 %v1365, %v1434
        %v1467 = vadd.f32 %v1366, %v1435
        %v1468 = vadd.f32 %v1367, %v1436
        %v1469 = vadd.f32 %v1368, %v1437
        %v1470 = vadd.f32 %v1369, %v1438
        %v1471 = vadd.f32 %v1370, %v1439
        %v1472 = vadd.f32 %v1371, %v1440
        %v1473 = vadd.f32 %v1372, %v1441
        %v1474 = vadd.f32 %v1373, %v1442
        %s1475 = scalar_lea.vmem [#allocation2], 64
        %v1476 = vld [vmem:[%s1475 + $0x7] sm:$0xff]
        %v1477 = vld [vmem:[%s1475 + $0xf] sm:$0xff]
        %v1478 = vld [vmem:[%s1475 + $0x27] sm:$0xff]
        %v1479 = vld [vmem:[%s1475 + $0x2f] sm:$0xff]
        %v1480 = vld [vmem:[%s1475 + $0x47] sm:$0xff]
        %v1481 = vld [vmem:[%s1475 + $0x4f] sm:$0xff]
        %v1482 = vld [vmem:[%s1475 + $0x67] sm:$0xff]
        %v1483 = vld [vmem:[%s1475 + $0x6f] sm:$0xff]
        %v1484 = vld [vmem:[%s1475 + $0x87] sm:$0xff]
        %v1485 = vld [vmem:[%s1475 + $0x8f] sm:$0xff]
        %v1486 = vld [vmem:[%s1475 + $0xa7] sm:$0xff]
        %v1487 = vld [vmem:[%s1475 + $0xaf] sm:$0xff]
        %v1488 = vld [vmem:[%s1475 + $0xc7] sm:$0xff]
        %v1489 = vld [vmem:[%s1475 + $0xcf] sm:$0xff]
        %v1490 = vld [vmem:[%s1475 + $0xe7] sm:$0xff]
        %v1491 = vld [vmem:[%s1475 + $0xef] sm:$0xff]
        %v1492 = vld [vmem:[%s1475 + $0x107] sm:$0xff]
        %v1493 = vld [vmem:[%s1475 + $0x10f] sm:$0xff]
        %v1494 = vld [vmem:[%s1475 + $0x127] sm:$0xff]
        %v1495 = vld [vmem:[%s1475 + $0x12f] sm:$0xff]
        %v1496 = vld [vmem:[%s1475 + $0x147] sm:$0xff]
        %v1497 = vld [vmem:[%s1475 + $0x14f] sm:$0xff]
        %v1498 = vld [vmem:[%s1475 + $0x167] sm:$0xff]
        %v1499 = vld [vmem:[%s1475 + $0x16f] sm:$0xff]
        %v1500 = vld [vmem:[%s1475 + $0x187] sm:$0xff]
        %v1501 = vld [vmem:[%s1475 + $0x18f] sm:$0xff]
        %v1502 = vld [vmem:[%s1475 + $0x1a7] sm:$0xff]
        %v1503 = vld [vmem:[%s1475 + $0x1af] sm:$0xff]
        %v1504 = vld [vmem:[%s1475 + $0x1c7] sm:$0xff]
        %v1505 = vld [vmem:[%s1475 + $0x1cf] sm:$0xff]
        %v1506 = vld [vmem:[%s1475 + $0x1e7] sm:$0xff]
        %v1507 = vld [vmem:[%s1475 + $0x1ef] sm:$0xff]
        %v1508 = vld [vmem:[%s4 + $0x6] sm:$0x1]
        %v1509 = vlaneseq
        %v1510 = vshrl.u32 %v1509, 7
        %v1511 = vsub.s32 0, %v1510
        %v1512 = vrot.slane %v1508, %v1511
        %v1513 = vmul.f32 %v1476, %v1512
        %v1514 = vmul.f32 %v1477, %v1512
        %v1515 = vmul.f32 %v1478, %v1512
        %v1516 = vmul.f32 %v1479, %v1512
        %v1517 = vmul.f32 %v1480, %v1512
        %v1518 = vmul.f32 %v1481, %v1512
        %v1519 = vmul.f32 %v1482, %v1512
        %v1520 = vmul.f32 %v1483, %v1512
        %v1521 = vmul.f32 %v1484, %v1512
        %v1522 = vmul.f32 %v1485, %v1512
        %v1523 = vmul.f32 %v1486, %v1512
        %v1524 = vmul.f32 %v1487, %v1512
        %v1525 = vmul.f32 %v1488, %v1512
        %v1526 = vmul.f32 %v1489, %v1512
        %v1527 = vmul.f32 %v1490, %v1512
        %v1528 = vmul.f32 %v1491, %v1512
        %v1529 = vmul.f32 %v1492, %v1512
        %v1530 = vmul.f32 %v1493, %v1512
        %v1531 = vmul.f32 %v1494, %v1512
        %v1532 = vmul.f32 %v1495, %v1512
        %v1533 = vmul.f32 %v1496, %v1512
        %v1534 = vmul.f32 %v1497, %v1512
        %v1535 = vmul.f32 %v1498, %v1512
        %v1536 = vmul.f32 %v1499, %v1512
        %v1537 = vmul.f32 %v1500, %v1512
        %v1538 = vmul.f32 %v1501, %v1512
        %v1539 = vmul.f32 %v1502, %v1512
        %v1540 = vmul.f32 %v1503, %v1512
        %v1541 = vmul.f32 %v1504, %v1512
        %v1542 = vmul.f32 %v1505, %v1512
        %v1543 = vmul.f32 %v1506, %v1512
        %v1544 = vmul.f32 %v1507, %v1512
        %v1545 = vadd.f32 %v1443, %v1513
        %v1546 = vadd.f32 %v1444, %v1514
        %v1547 = vadd.f32 %v1445, %v1515
        %v1548 = vadd.f32 %v1446, %v1516
        %v1549 = vadd.f32 %v1447, %v1517
        %v1550 = vadd.f32 %v1448, %v1518
        %v1551 = vadd.f32 %v1449, %v1519
        %v1552 = vadd.f32 %v1450, %v1520
        %v1553 = vadd.f32 %v1451, %v1521
        %v1554 = vadd.f32 %v1452, %v1522
        %v1555 = vadd.f32 %v1453, %v1523
        %v1556 = vadd.f32 %v1454, %v1524
        %v1557 = vadd.f32 %v1455, %v1525
        %v1558 = vadd.f32 %v1456, %v1526
        %v1559 = vadd.f32 %v1457, %v1527
        %v1560 = vadd.f32 %v1458, %v1528
        %v1561 = vadd.f32 %v1459, %v1529
        %v1562 = vadd.f32 %v1460, %v1530
        %v1563 = vadd.f32 %v1461, %v1531
        %v1564 = vadd.f32 %v1462, %v1532
        %v1565 = vadd.f32 %v1463, %v1533
        %v1566 = vadd.f32 %v1464, %v1534
        %v1567 = vadd.f32 %v1465, %v1535
        %v1568 = vadd.f32 %v1466, %v1536
        %v1569 = vadd.f32 %v1467, %v1537
        %v1570 = vadd.f32 %v1468, %v1538
        %v1571 = vadd.f32 %v1469, %v1539
        %v1572 = vadd.f32 %v1470, %v1540
        %v1573 = vadd.f32 %v1471, %v1541
        %v1574 = vadd.f32 %v1472, %v1542
        %v1575 = vadd.f32 %v1473, %v1543
        %v1576 = vadd.f32 %v1474, %v1544
        %v1577 = vld [vmem:[%s1475 + $0x8] sm:$0xff]
        %v1578 = vld [vmem:[%s1475 + $0x10] sm:$0xff]
        %v1579 = vld [vmem:[%s1475 + $0x28] sm:$0xff]
        %v1580 = vld [vmem:[%s1475 + $0x30] sm:$0xff]
        %v1581 = vld [vmem:[%s1475 + $0x48] sm:$0xff]
        %v1582 = vld [vmem:[%s1475 + $0x50] sm:$0xff]
        %v1583 = vld [vmem:[%s1475 + $0x68] sm:$0xff]
        %v1584 = vld [vmem:[%s1475 + $0x70] sm:$0xff]
        %v1585 = vld [vmem:[%s1475 + $0x88] sm:$0xff]
        %v1586 = vld [vmem:[%s1475 + $0x90] sm:$0xff]
        %v1587 = vld [vmem:[%s1475 + $0xa8] sm:$0xff]
        %v1588 = vld [vmem:[%s1475 + $0xb0] sm:$0xff]
        %v1589 = vld [vmem:[%s1475 + $0xc8] sm:$0xff]
        %v1590 = vld [vmem:[%s1475 + $0xd0] sm:$0xff]
        %v1591 = vld [vmem:[%s1475 + $0xe8] sm:$0xff]
        %v1592 = vld [vmem:[%s1475 + $0xf0] sm:$0xff]
        %v1593 = vld [vmem:[%s1475 + $0x108] sm:$0xff]
        %v1594 = vld [vmem:[%s1475 + $0x110] sm:$0xff]
        %v1595 = vld [vmem:[%s1475 + $0x128] sm:$0xff]
        %v1596 = vld [vmem:[%s1475 + $0x130] sm:$0xff]
        %v1597 = vld [vmem:[%s1475 + $0x148] sm:$0xff]
        %v1598 = vld [vmem:[%s1475 + $0x150] sm:$0xff]
        %v1599 = vld [vmem:[%s1475 + $0x168] sm:$0xff]
        %v1600 = vld [vmem:[%s1475 + $0x170] sm:$0xff]
        %v1601 = vld [vmem:[%s1475 + $0x188] sm:$0xff]
        %v1602 = vld [vmem:[%s1475 + $0x190] sm:$0xff]
        %v1603 = vld [vmem:[%s1475 + $0x1a8] sm:$0xff]
        %v1604 = vld [vmem:[%s1475 + $0x1b0] sm:$0xff]
        %v1605 = vld [vmem:[%s1475 + $0x1c8] sm:$0xff]
        %v1606 = vld [vmem:[%s1475 + $0x1d0] sm:$0xff]
        %v1607 = vld [vmem:[%s1475 + $0x1e8] sm:$0xff]
        %v1608 = vld [vmem:[%s1475 + $0x1f0] sm:$0xff]
        %v1609 = vld [vmem:[%s4 + $0x7] sm:$0x1]
        %v1610 = vlaneseq
        %v1611 = vshrl.u32 %v1610, 7
        %v1612 = vsub.s32 0, %v1611
        %v1613 = vrot.slane %v1609, %v1612
        %v1614 = vmul.f32 %v1577, %v1613
        %v1615 = vmul.f32 %v1578, %v1613
        %v1616 = vmul.f32 %v1579, %v1613
        %v1617 = vmul.f32 %v1580, %v1613
        %v1618 = vmul.f32 %v1581, %v1613
        %v1619 = vmul.f32 %v1582, %v1613
        %v1620 = vmul.f32 %v1583, %v1613
        %v1621 = vmul.f32 %v1584, %v1613
        %v1622 = vmul.f32 %v1585, %v1613
        %v1623 = vmul.f32 %v1586, %v1613
        %v1624 = vmul.f32 %v1587, %v1613
        %v1625 = vmul.f32 %v1588, %v1613
        %v1626 = vmul.f32 %v1589, %v1613
        %v1627 = vmul.f32 %v1590, %v1613
        %v1628 = vmul.f32 %v1591, %v1613
        %v1629 = vmul.f32 %v1592, %v1613
        %v1630 = vmul.f32 %v1593, %v1613
        %v1631 = vmul.f32 %v1594, %v1613
        %v1632 = vmul.f32 %v1595, %v1613
        %v1633 = vmul.f32 %v1596, %v1613
        %v1634 = vmul.f32 %v1597, %v1613
        %v1635 = vmul.f32 %v1598, %v1613
        %v1636 = vmul.f32 %v1599, %v1613
        %v1637 = vmul.f32 %v1600, %v1613
        %v1638 = vmul.f32 %v1601, %v1613
        %v1639 = vmul.f32 %v1602, %v1613
        %v1640 = vmul.f32 %v1603, %v1613
        %v1641 = vmul.f32 %v1604, %v1613
        %v1642 = vmul.f32 %v1605, %v1613
        %v1643 = vmul.f32 %v1606, %v1613
        %v1644 = vmul.f32 %v1607, %v1613
        %v1645 = vmul.f32 %v1608, %v1613
        %v1646 = vadd.f32 %v1545, %v1614
        %v1647 = vadd.f32 %v1546, %v1615
        %v1648 = vadd.f32 %v1547, %v1616
        %v1649 = vadd.f32 %v1548, %v1617
        %v1650 = vadd.f32 %v1549, %v1618
        %v1651 = vadd.f32 %v1550, %v1619
        %v1652 = vadd.f32 %v1551, %v1620
        %v1653 = vadd.f32 %v1552, %v1621
        %v1654 = vadd.f32 %v1553, %v1622
        %v1655 = vadd.f32 %v1554, %v1623
        %v1656 = vadd.f32 %v1555, %v1624
        %v1657 = vadd.f32 %v1556, %v1625
        %v1658 = vadd.f32 %v1557, %v1626
        %v1659 = vadd.f32 %v1558, %v1627
        %v1660 = vadd.f32 %v1559, %v1628
        %v1661 = vadd.f32 %v1560, %v1629
        %v1662 = vadd.f32 %v1561, %v1630
        %v1663 = vadd.f32 %v1562, %v1631
        %v1664 = vadd.f32 %v1563, %v1632
        %v1665 = vadd.f32 %v1564, %v1633
        %v1666 = vadd.f32 %v1565, %v1634
        %v1667 = vadd.f32 %v1566, %v1635
        %v1668 = vadd.f32 %v1567, %v1636
        %v1669 = vadd.f32 %v1568, %v1637
        %v1670 = vadd.f32 %v1569, %v1638
        %v1671 = vadd.f32 %v1570, %v1639
        %v1672 = vadd.f32 %v1571, %v1640
        %v1673 = vadd.f32 %v1572, %v1641
        %v1674 = vadd.f32 %v1573, %v1642
        %v1675 = vadd.f32 %v1574, %v1643
        %v1676 = vadd.f32 %v1575, %v1644
        %v1677 = vadd.f32 %v1576, %v1645
        %v1678 = vld [vmem:[%s1475 + $0x9] sm:$0xff]
        %v1679 = vld [vmem:[%s1475 + $0x11] sm:$0xff]
        %v1680 = vld [vmem:[%s1475 + $0x29] sm:$0xff]
        %v1681 = vld [vmem:[%s1475 + $0x31] sm:$0xff]
        %v1682 = vld [vmem:[%s1475 + $0x49] sm:$0xff]
        %v1683 = vld [vmem:[%s1475 + $0x51] sm:$0xff]
        %v1684 = vld [vmem:[%s1475 + $0x69] sm:$0xff]
        %v1685 = vld [vmem:[%s1475 + $0x71] sm:$0xff]
        %v1686 = vld [vmem:[%s1475 + $0x89] sm:$0xff]
        %v1687 = vld [vmem:[%s1475 + $0x91] sm:$0xff]
        %v1688 = vld [vmem:[%s1475 + $0xa9] sm:$0xff]
        %v1689 = vld [vmem:[%s1475 + $0xb1] sm:$0xff]
        %v1690 = vld [vmem:[%s1475 + $0xc9] sm:$0xff]
        %v1691 = vld [vmem:[%s1475 + $0xd1] sm:$0xff]
        %v1692 = vld [vmem:[%s1475 + $0xe9] sm:$0xff]
        %v1693 = vld [vmem:[%s1475 + $0xf1] sm:$0xff]
        %v1694 = vld [vmem:[%s1475 + $0x109] sm:$0xff]
        %v1695 = vld [vmem:[%s1475 + $0x111] sm:$0xff]
        %v1696 = vld [vmem:[%s1475 + $0x129] sm:$0xff]
        %v1697 = vld [vmem:[%s1475 + $0x131] sm:$0xff]
        %v1698 = vld [vmem:[%s1475 + $0x149] sm:$0xff]
        %v1699 = vld [vmem:[%s1475 + $0x151] sm:$0xff]
        %v1700 = vld [vmem:[%s1475 + $0x169] sm:$0xff]
        %v1701 = vld [vmem:[%s1475 + $0x171] sm:$0xff]
        %v1702 = vld [vmem:[%s1475 + $0x189] sm:$0xff]
        %v1703 = vld [vmem:[%s1475 + $0x191] sm:$0xff]
        %v1704 = vld [vmem:[%s1475 + $0x1a9] sm:$0xff]
        %v1705 = vld [vmem:[%s1475 + $0x1b1] sm:$0xff]
        %v1706 = vld [vmem:[%s1475 + $0x1c9] sm:$0xff]
        %v1707 = vld [vmem:[%s1475 + $0x1d1] sm:$0xff]
        %v1708 = vld [vmem:[%s1475 + $0x1e9] sm:$0xff]
        %v1709 = vld [vmem:[%s1475 + $0x1f1] sm:$0xff]
        %v1710 = vld [vmem:[%s4 + $0x8] sm:$0x1]
        %v1711 = vlaneseq
        %v1712 = vshrl.u32 %v1711, 7
        %v1713 = vsub.s32 0, %v1712
        %v1714 = vrot.slane %v1710, %v1713
        %v1715 = vmul.f32 %v1678, %v1714
        %v1716 = vmul.f32 %v1679, %v1714
        %v1717 = vmul.f32 %v1680, %v1714
        %v1718 = vmul.f32 %v1681, %v1714
        %v1719 = vmul.f32 %v1682, %v1714
        %v1720 = vmul.f32 %v1683, %v1714
        %v1721 = vmul.f32 %v1684, %v1714
        %v1722 = vmul.f32 %v1685, %v1714
        %v1723 = vmul.f32 %v1686, %v1714
        %v1724 = vmul.f32 %v1687, %v1714
        %v1725 = vmul.f32 %v1688, %v1714
        %v1726 = vmul.f32 %v1689, %v1714
        %v1727 = vmul.f32 %v1690, %v1714
        %v1728 = vmul.f32 %v1691, %v1714
        %v1729 = vmul.f32 %v1692, %v1714
        %v1730 = vmul.f32 %v1693, %v1714
        %v1731 = vmul.f32 %v1694, %v1714
        %v1732 = vmul.f32 %v1695, %v1714
        %v1733 = vmul.f32 %v1696, %v1714
        %v1734 = vmul.f32 %v1697, %v1714
        %v1735 = vmul.f32 %v1698, %v1714
        %v1736 = vmul.f32 %v1699, %v1714
        %v1737 = vmul.f32 %v1700, %v1714
        %v1738 = vmul.f32 %v1701, %v1714
        %v1739 = vmul.f32 %v1702, %v1714
        %v1740 = vmul.f32 %v1703, %v1714
        %v1741 = vmul.f32 %v1704, %v1714
        %v1742 = vmul.f32 %v1705, %v1714
        %v1743 = vmul.f32 %v1706, %v1714
        %v1744 = vmul.f32 %v1707, %v1714
        %v1745 = vmul.f32 %v1708, %v1714
        %v1746 = vmul.f32 %v1709, %v1714
        %v1747 = vadd.f32 %v1646, %v1715
        %v1748 = vadd.f32 %v1647, %v1716
        %v1749 = vadd.f32 %v1648, %v1717
        %v1750 = vadd.f32 %v1649, %v1718
        %v1751 = vadd.f32 %v1650, %v1719
        %v1752 = vadd.f32 %v1651, %v1720
        %v1753 = vadd.f32 %v1652, %v1721
        %v1754 = vadd.f32 %v1653, %v1722
        %v1755 = vadd.f32 %v1654, %v1723
        %v1756 = vadd.f32 %v1655, %v1724
        %v1757 = vadd.f32 %v1656, %v1725
        %v1758 = vadd.f32 %v1657, %v1726
        %v1759 = vadd.f32 %v1658, %v1727
        %v1760 = vadd.f32 %v1659, %v1728
        %v1761 = vadd.f32 %v1660, %v1729
        %v1762 = vadd.f32 %v1661, %v1730
        %v1763 = vadd.f32 %v1662, %v1731
        %v1764 = vadd.f32 %v1663, %v1732
        %v1765 = vadd.f32 %v1664, %v1733
        %v1766 = vadd.f32 %v1665, %v1734
        %v1767 = vadd.f32 %v1666, %v1735
        %v1768 = vadd.f32 %v1667, %v1736
        %v1769 = vadd.f32 %v1668, %v1737
        %v1770 = vadd.f32 %v1669, %v1738
        %v1771 = vadd.f32 %v1670, %v1739
        %v1772 = vadd.f32 %v1671, %v1740
        %v1773 = vadd.f32 %v1672, %v1741
        %v1774 = vadd.f32 %v1673, %v1742
        %v1775 = vadd.f32 %v1674, %v1743
        %v1776 = vadd.f32 %v1675, %v1744
        %v1777 = vadd.f32 %v1676, %v1745
        %v1778 = vadd.f32 %v1677, %v1746
        %v1779 = vld [vmem:[%s5] sm:$0x1]
        %v1781 = vlaneseq
        %v1782 = vshrl.u32 %v1781, 7
        %v1783 = vsub.s32 0, %v1782
        %v1784 = vrot.slane %v1779, %v1783
        %v1786 = vmul.f32 %v1747, %v1784
        %v1787 = vmul.f32 %v1748, %v1784
        %v1788 = vmul.f32 %v1749, %v1784
        %v1789 = vmul.f32 %v1750, %v1784
        %v1790 = vmul.f32 %v1751, %v1784
        %v1791 = vmul.f32 %v1752, %v1784
        %v1792 = vmul.f32 %v1753, %v1784
        %v1793 = vmul.f32 %v1754, %v1784
        %v1794 = vmul.f32 %v1755, %v1784
        %v1795 = vmul.f32 %v1756, %v1784
        %v1796 = vmul.f32 %v1757, %v1784
        %v1797 = vmul.f32 %v1758, %v1784
        %v1798 = vmul.f32 %v1759, %v1784
        %v1799 = vmul.f32 %v1760, %v1784
        %v1800 = vmul.f32 %v1761, %v1784
        %v1801 = vmul.f32 %v1762, %v1784
        %v1802 = vmul.f32 %v1763, %v1784
        %v1803 = vmul.f32 %v1764, %v1784
        %v1804 = vmul.f32 %v1765, %v1784
        %v1805 = vmul.f32 %v1766, %v1784
        %v1806 = vmul.f32 %v1767, %v1784
        %v1807 = vmul.f32 %v1768, %v1784
        %v1808 = vmul.f32 %v1769, %v1784
        %v1809 = vmul.f32 %v1770, %v1784
        %v1810 = vmul.f32 %v1771, %v1784
        %v1811 = vmul.f32 %v1772, %v1784
        %v1812 = vmul.f32 %v1773, %v1784
        %v1813 = vmul.f32 %v1774, %v1784
        %v1814 = vmul.f32 %v1775, %v1784
        %v1815 = vmul.f32 %v1776, %v1784
        %v1816 = vmul.f32 %v1777, %v1784
        %v1817 = vmul.f32 %v1778, %v1784
        %v1818 = vld [vmem:[%s6] sm:$0x1]
        %v1820 = vlaneseq
        %v1821 = vshrl.u32 %v1820, 7
        %v1822 = vsub.s32 0, %v1821
        %v1823 = vrot.slane %v1818, %v1822
        %v1825 = vadd.f32 %v1786, %v1823
        %v1826 = vadd.f32 %v1787, %v1823
        %v1827 = vadd.f32 %v1788, %v1823
        %v1828 = vadd.f32 %v1789, %v1823
        %v1829 = vadd.f32 %v1790, %v1823
        %v1830 = vadd.f32 %v1791, %v1823
        %v1831 = vadd.f32 %v1792, %v1823
        %v1832 = vadd.f32 %v1793, %v1823
        %v1833 = vadd.f32 %v1794, %v1823
        %v1834 = vadd.f32 %v1795, %v1823
        %v1835 = vadd.f32 %v1796, %v1823
        %v1836 = vadd.f32 %v1797, %v1823
        %v1837 = vadd.f32 %v1798, %v1823
        %v1838 = vadd.f32 %v1799, %v1823
        %v1839 = vadd.f32 %v1800, %v1823
        %v1840 = vadd.f32 %v1801, %v1823
        %v1841 = vadd.f32 %v1802, %v1823
        %v1842 = vadd.f32 %v1803, %v1823
        %v1843 = vadd.f32 %v1804, %v1823
        %v1844 = vadd.f32 %v1805, %v1823
        %v1845 = vadd.f32 %v1806, %v1823
        %v1846 = vadd.f32 %v1807, %v1823
        %v1847 = vadd.f32 %v1808, %v1823
        %v1848 = vadd.f32 %v1809, %v1823
        %v1849 = vadd.f32 %v1810, %v1823
        %v1850 = vadd.f32 %v1811, %v1823
        %v1851 = vadd.f32 %v1812, %v1823
        %v1852 = vadd.f32 %v1813, %v1823
        %v1853 = vadd.f32 %v1814, %v1823
        %v1854 = vadd.f32 %v1815, %v1823
        %v1855 = vadd.f32 %v1816, %v1823
        %v1856 = vadd.f32 %v1817, %v1823
        %v1857 = vpack.c.bf16 %v1826, %v1825
        %v1858 = vpack.c.bf16 %v1828, %v1827
        %v1859 = vpack.c.bf16 %v1830, %v1829
        %v1860 = vpack.c.bf16 %v1832, %v1831
        %v1861 = vpack.c.bf16 %v1834, %v1833
        %v1862 = vpack.c.bf16 %v1836, %v1835
        %v1863 = vpack.c.bf16 %v1838, %v1837
        %v1864 = vpack.c.bf16 %v1840, %v1839
        %v1865 = vpack.c.bf16 %v1842, %v1841
        %v1866 = vpack.c.bf16 %v1844, %v1843
        %v1867 = vpack.c.bf16 %v1846, %v1845
        %v1868 = vpack.c.bf16 %v1848, %v1847
        %v1869 = vpack.c.bf16 %v1850, %v1849
        %v1870 = vpack.c.bf16 %v1852, %v1851
        %v1871 = vpack.c.bf16 %v1854, %v1853
        %v1872 = vpack.c.bf16 %v1856, %v1855
        %v1873 = vld [vmem:[%s7] sm:$0x7]
        %v1875 = vsel %vm763, %v1857, 0
        %v1878 = vsel %vm763, %v1858, 0
        %v1881 = vsel %vm763, %v1859, 0
        %v1884 = vsel %vm763, %v1860, 0
        %v1887 = vsel %vm763, %v1861, 0
        %v1890 = vsel %vm763, %v1862, 0
        %v1893 = vsel %vm763, %v1863, 0
        %v1896 = vsel %vm763, %v1864, 0
        %v1899 = vsel %vm763, %v1865, 0
        %v1902 = vsel %vm763, %v1866, 0
        %v1905 = vsel %vm763, %v1867, 0
        %v1908 = vsel %vm763, %v1868, 0
        %v1911 = vsel %vm763, %v1869, 0
        %v1914 = vsel %vm763, %v1870, 0
        %v1917 = vsel %vm763, %v1871, 0
        %v1920 = vsel %vm763, %v1872, 0
        %vm1922 = vcmask 1042432
        %v1924 = vsel %vm1922, %v1873, 0
        %1926 = vmatprep.subr.bf16.mxu0 0
        %1927 = vmatpush1.bf16.msra.mxu0 0
        %1928 = vmatprep.subr.bf16.mxu0 0
        %1929 = vmatpush1.bf16.msra.mxu0 0
        %1930 = vmatprep.subr.bf16.mxu0 0
        %1931 = vmatpush1.bf16.msra.mxu0 0
        %1932 = vmatprep.subr.bf16.mxu0 0
        %1933 = vmatpush1.bf16.msra.mxu0 0
        %1934 = vmatprep.subr.bf16.mxu0 0
        %1935 = vmatpush1.bf16.msra.mxu0 0
        %1936 = vmatprep.subr.bf16.mxu0 0
        %1937 = vmatpush1.bf16.msra.mxu0 0
        %1938 = vmatprep.subr.bf16.mxu0 0
        %1939 = vmatpush1.bf16.msra.mxu0 0
        %1940 = vmatprep.subr.bf16.mxu0 0
        %1941 = vmatpush1.bf16.msra.mxu0 %v1924
        %1942 = vmatprep.subr.bf16.mxu0 0
        %1943 = vmatpush2.bf16.msra.mxu0 0
        %1944 = vmatprep.subr.bf16.mxu0 0
        %1945 = vmatpush2.bf16.msra.mxu0 0
        %1946 = vmatprep.subr.bf16.mxu0 0
        %1947 = vmatpush2.bf16.msra.mxu0 0
        %1948 = vmatprep.subr.bf16.mxu0 0
        %1949 = vmatpush2.bf16.msra.mxu0 0
        %1950 = vmatprep.subr.bf16.mxu0 0
        %1951 = vmatpush2.bf16.msra.mxu0 0
        %1952 = vmatprep.subr.bf16.mxu0 0
        %1953 = vmatpush2.bf16.msra.mxu0 0
        %1954 = vmatprep.subr.bf16.mxu0 0
        %1955 = vmatpush2.bf16.msra.mxu0 0
        %1956 = vmatprep.subr.bf16.mxu0 0
        %1957 = vmatpush2.bf16.msra.mxu0 0
        %1958 = vmatprep.mubr.bf16.mxu0 0
        %1959 = vmatmul.mubr.bf16.gmra.mxu0 %v1875
        %v1960 = vpop.f32.mrf.mxu0
        %v1961 = vadd.f32 0.0, %v1960
        %v1962 = vpop.f32.mrf.mxu0
        %v1963 = vpop.f32.mrf.mxu0
        %v1964 = vadd.f32 0.0, %v1963
        %v1965 = vpop.f32.mrf.mxu0
        %1966 = vmatprep.mubr.bf16.mxu0 0
        %1967 = vmatmul.mubr.bf16.gmra.mxu0 %v1878
        %v1968 = vpop.f32.mrf.mxu0
        %v1969 = vadd.f32 0.0, %v1968
        %v1970 = vpop.f32.mrf.mxu0
        %v1971 = vpop.f32.mrf.mxu0
        %v1972 = vadd.f32 0.0, %v1971
        %v1973 = vpop.f32.mrf.mxu0
        %1974 = vmatprep.mubr.bf16.mxu0 0
        %1975 = vmatmul.mubr.bf16.gmra.mxu0 %v1881
        %v1976 = vpop.f32.mrf.mxu0
        %v1977 = vadd.f32 0.0, %v1976
        %v1978 = vpop.f32.mrf.mxu0
        %v1979 = vpop.f32.mrf.mxu0
        %v1980 = vadd.f32 0.0, %v1979
        %v1981 = vpop.f32.mrf.mxu0
        %1982 = vmatprep.mubr.bf16.mxu0 0
        %1983 = vmatmul.mubr.bf16.gmra.mxu0 %v1884
        %v1984 = vpop.f32.mrf.mxu0
        %v1985 = vadd.f32 0.0, %v1984
        %v1986 = vpop.f32.mrf.mxu0
        %v1987 = vpop.f32.mrf.mxu0
        %v1988 = vadd.f32 0.0, %v1987
        %v1989 = vpop.f32.mrf.mxu0
        %1990 = vmatprep.mubr.bf16.mxu0 0
        %1991 = vmatmul.mubr.bf16.gmra.mxu0 %v1887
        %v1992 = vpop.f32.mrf.mxu0
        %v1993 = vadd.f32 0.0, %v1992
        %v1994 = vpop.f32.mrf.mxu0
        %v1995 = vpop.f32.mrf.mxu0
        %v1996 = vadd.f32 0.0, %v1995
        %v1997 = vpop.f32.mrf.mxu0
        %1998 = vmatprep.mubr.bf16.mxu0 0
        %1999 = vmatmul.mubr.bf16.gmra.mxu0 %v1890
        %v2000 = vpop.f32.mrf.mxu0
        %v2001 = vadd.f32 0.0, %v2000
        %v2002 = vpop.f32.mrf.mxu0
        %v2003 = vpop.f32.mrf.mxu0
        %v2004 = vadd.f32 0.0, %v2003
        %v2005 = vpop.f32.mrf.mxu0
        %2006 = vmatprep.mubr.bf16.mxu0 0
        %2007 = vmatmul.mubr.bf16.gmra.mxu0 %v1893
        %v2008 = vpop.f32.mrf.mxu0
        %v2009 = vadd.f32 0.0, %v2008
        %v2010 = vpop.f32.mrf.mxu0
        %v2011 = vpop.f32.mrf.mxu0
        %v2012 = vadd.f32 0.0, %v2011
        %v2013 = vpop.f32.mrf.mxu0
        %2014 = vmatprep.mubr.bf16.mxu0 0
        %2015 = vmatmul.mubr.bf16.gmra.mxu0 %v1896
        %v2016 = vpop.f32.mrf.mxu0
        %v2017 = vadd.f32 0.0, %v2016
        %v2018 = vpop.f32.mrf.mxu0
        %v2019 = vpop.f32.mrf.mxu0
        %v2020 = vadd.f32 0.0, %v2019
        %v2021 = vpop.f32.mrf.mxu0
        %2022 = vmatprep.mubr.bf16.mxu0 0
        %2023 = vmatmul.mubr.bf16.gmra.mxu0 %v1899
        %v2024 = vpop.f32.mrf.mxu0
        %v2025 = vadd.f32 0.0, %v2024
        %v2026 = vpop.f32.mrf.mxu0
        %v2027 = vpop.f32.mrf.mxu0
        %v2028 = vadd.f32 0.0, %v2027
        %v2029 = vpop.f32.mrf.mxu0
        %2030 = vmatprep.mubr.bf16.mxu0 0
        %2031 = vmatmul.mubr.bf16.gmra.mxu0 %v1902
        %v2032 = vpop.f32.mrf.mxu0
        %v2033 = vadd.f32 0.0, %v2032
        %v2034 = vpop.f32.mrf.mxu0
        %v2035 = vpop.f32.mrf.mxu0
        %v2036 = vadd.f32 0.0, %v2035
        %v2037 = vpop.f32.mrf.mxu0
        %2038 = vmatprep.mubr.bf16.mxu0 0
        %2039 = vmatmul.mubr.bf16.gmra.mxu0 %v1905
        %v2040 = vpop.f32.mrf.mxu0
        %v2041 = vadd.f32 0.0, %v2040
        %v2042 = vpop.f32.mrf.mxu0
        %v2043 = vpop.f32.mrf.mxu0
        %v2044 = vadd.f32 0.0, %v2043
        %v2045 = vpop.f32.mrf.mxu0
        %2046 = vmatprep.mubr.bf16.mxu0 0
        %2047 = vmatmul.mubr.bf16.gmra.mxu0 %v1908
        %v2048 = vpop.f32.mrf.mxu0
        %v2049 = vadd.f32 0.0, %v2048
        %v2050 = vpop.f32.mrf.mxu0
        %v2051 = vpop.f32.mrf.mxu0
        %v2052 = vadd.f32 0.0, %v2051
        %v2053 = vpop.f32.mrf.mxu0
        %2054 = vmatprep.mubr.bf16.mxu0 0
        %2055 = vmatmul.mubr.bf16.gmra.mxu0 %v1911
        %v2056 = vpop.f32.mrf.mxu0
        %v2057 = vadd.f32 0.0, %v2056
        %v2058 = vpop.f32.mrf.mxu0
        %v2059 = vpop.f32.mrf.mxu0
        %v2060 = vadd.f32 0.0, %v2059
        %v2061 = vpop.f32.mrf.mxu0
        %2062 = vmatprep.mubr.bf16.mxu0 0
        %2063 = vmatmul.mubr.bf16.gmra.mxu0 %v1914
        %v2064 = vpop.f32.mrf.mxu0
        %v2065 = vadd.f32 0.0, %v2064
        %v2066 = vpop.f32.mrf.mxu0
        %v2067 = vpop.f32.mrf.mxu0
        %v2068 = vadd.f32 0.0, %v2067
        %v2069 = vpop.f32.mrf.mxu0
        %2070 = vmatprep.mubr.bf16.mxu0 0
        %2071 = vmatmul.mubr.bf16.gmra.mxu0 %v1917
        %v2072 = vpop.f32.mrf.mxu0
        %v2073 = vadd.f32 0.0, %v2072
        %v2074 = vpop.f32.mrf.mxu0
        %v2075 = vpop.f32.mrf.mxu0
        %v2076 = vadd.f32 0.0, %v2075
        %v2077 = vpop.f32.mrf.mxu0
        %2078 = vmatprep.mubr.bf16.mxu0 0
        %2079 = vmatmul.mubr.bf16.gmra.mxu0 %v1920
        %v2080 = vpop.f32.mrf.mxu0
        %v2081 = vadd.f32 0.0, %v2080
        %v2082 = vpop.f32.mrf.mxu0
        %v2083 = vpop.f32.mrf.mxu0
        %v2084 = vadd.f32 0.0, %v2083
        %v2085 = vpop.f32.mrf.mxu0
        %2086 = vdwg.mxu0
        %v2087 = vld [vmem:[%s8] sm:$0x1]
        %v2089 = vlaneseq
        %v2090 = vshrl.u32 %v2089, 7
        %v2091 = vsub.s32 0, %v2090
        %v2092 = vrot.slane %v2087, %v2091
        %v2094 = vmul.f32 %v1961, %v2092
        %v2095 = vmul.f32 %v1964, %v2092
        %v2096 = vmul.f32 %v1969, %v2092
        %v2097 = vmul.f32 %v1972, %v2092
        %v2098 = vmul.f32 %v1977, %v2092
        %v2099 = vmul.f32 %v1980, %v2092
        %v2100 = vmul.f32 %v1985, %v2092
        %v2101 = vmul.f32 %v1988, %v2092
        %v2102 = vmul.f32 %v1993, %v2092
        %v2103 = vmul.f32 %v1996, %v2092
        %v2104 = vmul.f32 %v2001, %v2092
        %v2105 = vmul.f32 %v2004, %v2092
        %v2106 = vmul.f32 %v2009, %v2092
        %v2107 = vmul.f32 %v2012, %v2092
        %v2108 = vmul.f32 %v2017, %v2092
        %v2109 = vmul.f32 %v2020, %v2092
        %v2110 = vmul.f32 %v2025, %v2092
        %v2111 = vmul.f32 %v2028, %v2092
        %v2112 = vmul.f32 %v2033, %v2092
        %v2113 = vmul.f32 %v2036, %v2092
        %v2114 = vmul.f32 %v2041, %v2092
        %v2115 = vmul.f32 %v2044, %v2092
        %v2116 = vmul.f32 %v2049, %v2092
        %v2117 = vmul.f32 %v2052, %v2092
        %v2118 = vmul.f32 %v2057, %v2092
        %v2119 = vmul.f32 %v2060, %v2092
        %v2120 = vmul.f32 %v2065, %v2092
        %v2121 = vmul.f32 %v2068, %v2092
        %v2122 = vmul.f32 %v2073, %v2092
        %v2123 = vmul.f32 %v2076, %v2092
        %v2124 = vmul.f32 %v2081, %v2092
        %v2125 = vmul.f32 %v2084, %v2092
        %v2126 = vld [vmem:[%s9] sm:$0x1]
        %v2128 = vlaneseq
        %v2129 = vshrl.u32 %v2128, 7
        %v2130 = vsub.s32 0, %v2129
        %v2131 = vrot.slane %v2126, %v2130
        %v2133 = vadd.f32 %v2094, %v2131
        %v2134 = vadd.f32 %v2095, %v2131
        %v2135 = vadd.f32 %v2096, %v2131
        %v2136 = vadd.f32 %v2097, %v2131
        %v2137 = vadd.f32 %v2098, %v2131
        %v2138 = vadd.f32 %v2099, %v2131
        %v2139 = vadd.f32 %v2100, %v2131
        %v2140 = vadd.f32 %v2101, %v2131
        %v2141 = vadd.f32 %v2102, %v2131
        %v2142 = vadd.f32 %v2103, %v2131
        %v2143 = vadd.f32 %v2104, %v2131
        %v2144 = vadd.f32 %v2105, %v2131
        %v2145 = vadd.f32 %v2106, %v2131
        %v2146 = vadd.f32 %v2107, %v2131
        %v2147 = vadd.f32 %v2108, %v2131
        %v2148 = vadd.f32 %v2109, %v2131
        %v2149 = vadd.f32 %v2110, %v2131
        %v2150 = vadd.f32 %v2111, %v2131
        %v2151 = vadd.f32 %v2112, %v2131
        %v2152 = vadd.f32 %v2113, %v2131
        %v2153 = vadd.f32 %v2114, %v2131
        %v2154 = vadd.f32 %v2115, %v2131
        %v2155 = vadd.f32 %v2116, %v2131
        %v2156 = vadd.f32 %v2117, %v2131
        %v2157 = vadd.f32 %v2118, %v2131
        %v2158 = vadd.f32 %v2119, %v2131
        %v2159 = vadd.f32 %v2120, %v2131
        %v2160 = vadd.f32 %v2121, %v2131
        %v2161 = vadd.f32 %v2122, %v2131
        %v2162 = vadd.f32 %v2123, %v2131
        %v2163 = vadd.f32 %v2124, %v2131
        %v2164 = vadd.f32 %v2125, %v2131
        %v2165 = vmax.f32 %v2133, 0.0
        %v2166 = vmax.f32 %v2134, 0.0
        %v2167 = vmax.f32 %v2135, 0.0
        %v2168 = vmax.f32 %v2136, 0.0
        %v2169 = vmax.f32 %v2137, 0.0
        %v2170 = vmax.f32 %v2138, 0.0
        %v2171 = vmax.f32 %v2139, 0.0
        %v2172 = vmax.f32 %v2140, 0.0
        %v2173 = vmax.f32 %v2141, 0.0
        %v2174 = vmax.f32 %v2142, 0.0
        %v2175 = vmax.f32 %v2143, 0.0
        %v2176 = vmax.f32 %v2144, 0.0
        %v2177 = vmax.f32 %v2145, 0.0
        %v2178 = vmax.f32 %v2146, 0.0
        %v2179 = vmax.f32 %v2147, 0.0
        %v2180 = vmax.f32 %v2148, 0.0
        %v2181 = vmax.f32 %v2149, 0.0
        %v2182 = vmax.f32 %v2150, 0.0
        %v2183 = vmax.f32 %v2151, 0.0
        %v2184 = vmax.f32 %v2152, 0.0
        %v2185 = vmax.f32 %v2153, 0.0
        %v2186 = vmax.f32 %v2154, 0.0
        %v2187 = vmax.f32 %v2155, 0.0
        %v2188 = vmax.f32 %v2156, 0.0
        %v2189 = vmax.f32 %v2157, 0.0
        %v2190 = vmax.f32 %v2158, 0.0
        %v2191 = vmax.f32 %v2159, 0.0
        %v2192 = vmax.f32 %v2160, 0.0
        %v2193 = vmax.f32 %v2161, 0.0
        %v2194 = vmax.f32 %v2162, 0.0
        %v2195 = vmax.f32 %v2163, 0.0
        %v2196 = vmax.f32 %v2164, 0.0
        %v2197 = vadd.f32 %v2165, %v379
        %v2198 = vadd.f32 %v2166, %v380
        %v2199 = vadd.f32 %v2167, %v381
        %v2200 = vadd.f32 %v2168, %v382
        %v2201 = vadd.f32 %v2169, %v383
        %v2202 = vadd.f32 %v2170, %v384
        %v2203 = vadd.f32 %v2171, %v385
        %v2204 = vadd.f32 %v2172, %v386
        %v2205 = vadd.f32 %v2173, %v387
        %v2206 = vadd.f32 %v2174, %v388
        %v2207 = vadd.f32 %v2175, %v389
        %v2208 = vadd.f32 %v2176, %v390
        %v2209 = vadd.f32 %v2177, %v391
        %v2210 = vadd.f32 %v2178, %v392
        %v2211 = vadd.f32 %v2179, %v393
        %v2212 = vadd.f32 %v2180, %v394
        %v2213 = vadd.f32 %v2181, %v395
        %v2214 = vadd.f32 %v2182, %v396
        %v2215 = vadd.f32 %v2183, %v397
        %v2216 = vadd.f32 %v2184, %v398
        %v2217 = vadd.f32 %v2185, %v399
        %v2218 = vadd.f32 %v2186, %v400
        %v2219 = vadd.f32 %v2187, %v401
        %v2220 = vadd.f32 %v2188, %v402
        %v2221 = vadd.f32 %v2189, %v403
        %v2222 = vadd.f32 %v2190, %v404
        %v2223 = vadd.f32 %v2191, %v405
        %v2224 = vadd.f32 %v2192, %v406
        %v2225 = vadd.f32 %v2193, %v407
        %v2226 = vadd.f32 %v2194, %v408
        %v2227 = vadd.f32 %v2195, %v409
        %v2228 = vadd.f32 %v2196, %v410
        %2229 = vst.msk [vmem:[%s377] sm:$0xff] %vm439, %v2197
        %2230 = vst.msk [vmem:[%s377 + $0x8] sm:$0xff] %vm439, %v2198
        %2231 = vst.msk [vmem:[%s377 + $0x10] sm:$0xff] %vm439, %v2199
        %2232 = vst.msk [vmem:[%s377 + $0x18] sm:$0xff] %vm439, %v2200
        %2233 = vst.msk [vmem:[%s377 + $0x20] sm:$0xff] %vm439, %v2201
        %2234 = vst.msk [vmem:[%s377 + $0x28] sm:$0xff] %vm439, %v2202
        %2235 = vst.msk [vmem:[%s377 + $0x30] sm:$0xff] %vm439, %v2203
        %2236 = vst.msk [vmem:[%s377 + $0x38] sm:$0xff] %vm439, %v2204
        %2237 = vst.msk [vmem:[%s377 + $0x40] sm:$0xff] %vm439, %v2205
        %2238 = vst.msk [vmem:[%s377 + $0x48] sm:$0xff] %vm439, %v2206
        %2239 = vst.msk [vmem:[%s377 + $0x50] sm:$0xff] %vm439, %v2207
        %2240 = vst.msk [vmem:[%s377 + $0x58] sm:$0xff] %vm439, %v2208
        %2241 = vst.msk [vmem:[%s377 + $0x60] sm:$0xff] %vm439, %v2209
        %2242 = vst.msk [vmem:[%s377 + $0x68] sm:$0xff] %vm439, %v2210
        %2243 = vst.msk [vmem:[%s377 + $0x70] sm:$0xff] %vm439, %v2211
        %2244 = vst.msk [vmem:[%s377 + $0x78] sm:$0xff] %vm439, %v2212
        %2245 = vst.msk [vmem:[%s377 + $0x80] sm:$0xff] %vm439, %v2213
        %2246 = vst.msk [vmem:[%s377 + $0x88] sm:$0xff] %vm439, %v2214
        %2247 = vst.msk [vmem:[%s377 + $0x90] sm:$0xff] %vm439, %v2215
        %2248 = vst.msk [vmem:[%s377 + $0x98] sm:$0xff] %vm439, %v2216
        %2249 = vst.msk [vmem:[%s377 + $0xa0] sm:$0xff] %vm439, %v2217
        %2250 = vst.msk [vmem:[%s377 + $0xa8] sm:$0xff] %vm439, %v2218
        %2251 = vst.msk [vmem:[%s377 + $0xb0] sm:$0xff] %vm439, %v2219
        %2252 = vst.msk [vmem:[%s377 + $0xb8] sm:$0xff] %vm439, %v2220
        %2253 = vst.msk [vmem:[%s377 + $0xc0] sm:$0xff] %vm439, %v2221
        %2254 = vst.msk [vmem:[%s377 + $0xc8] sm:$0xff] %vm439, %v2222
        %2255 = vst.msk [vmem:[%s377 + $0xd0] sm:$0xff] %vm439, %v2223
        %2256 = vst.msk [vmem:[%s377 + $0xd8] sm:$0xff] %vm439, %v2224
        %2257 = vst.msk [vmem:[%s377 + $0xe0] sm:$0xff] %vm439, %v2225
        %2258 = vst.msk [vmem:[%s377 + $0xe8] sm:$0xff] %vm439, %v2226
        %2259 = vst.msk [vmem:[%s377 + $0xf0] sm:$0xff] %vm439, %v2227
        %2260 = vst.msk [vmem:[%s377 + $0xf8] sm:$0xff] %vm439, %v2228
        %s2261 = sand.u32 %s250, 1
        %s2262 = scalar_lea.sflag [#allocation5], %s2261
        %s2263 = sand.u32 %s250, 1
        %s2264 = smul.addr %s2263, 256
        %s2265 = scalar_lea.vmem [#allocation6], %s2264
        // Predicated region
        $region65: #{tpu_custom_call.1} parent=59 // pred_check
          %p2266 = pneg %p260
        $region66: #{tpu_custom_call.1} parent=59 // pred_check_branch
          %2268 = sbr.rel (%p2266) target = $region68
        $region67: #{tpu_custom_call.1} parent=59 // pred_region
          %s2270 = ssub.s32 4096, 4096
          %2271 = vsyncadd %s2262, %s2270
          %s2272 = smul.addr %s27, 32
          %s2273 = smul.addr %s2272, 128
          %s2274 = scalar_lea.hbm %s10, %s2273
          %s2275 = sshll.u32 %s2265, 4
          %s2276 = int_to_ptr.vmem [resolvable:$true] %s2275
          %2281 = dma.vmem_to_hbm [thread:$0]  %s2276, 4096, %s2274, %s2262, 128, 128, 8
        $region68: #{tpu_custom_call.1} parent=59 // pred_fallthru
          _
      $region60: #{tpu_custom_call.1} parent=5 // pred_fallthru
        _
      %p2282 = scmp.le.s32.totalorder 2, %s22
      // Predicated region
      $region69: #{tpu_custom_call.1} parent=5 // pred_check
        %p2283 = pneg %p2282
      $region70: #{tpu_custom_call.1} parent=5 // pred_check_branch
        %2285 = sbr.rel (%p2283) target = $region72
      $region71: #{tpu_custom_call.1} parent=5 // pred_region
        %s2286 = ssub.s32 %s22, 2
        // Predicated region
        $region73: #{tpu_custom_call.1} parent=71 // pred_check
          %p2287 = pneg %p266
        $region74: #{tpu_custom_call.1} parent=71 // pred_check_branch
          %2289 = sbr.rel (%p2287) target = $region76
        $region75: #{tpu_custom_call.1} parent=71 // pred_region
          %s2290 = sand.u32 %s251, 1
          %s2291 = scalar_lea.sflag [#allocation5], %s2290
          %s2292 = sand.u32 %s251, 1
          %s2293 = smul.addr %s2292, 256
          %s2294 = scalar_lea.vmem [#allocation6], %s2293
          %2295 = dma.done %s2291, 4096
        $region76: #{tpu_custom_call.1} parent=71 // pred_fallthru
          _
      $region72: #{tpu_custom_call.1} parent=5 // pred_fallthru
        _
    $region6: #{tpu_custom_call.1} parent=1 // loop_footer
      %s26 = sadd.s32 1, %s22
    $region7: #{tpu_custom_call.1} parent=1 // loop_footer_branch
      %21 = sbr.rel target = $region3
    $region8: #{tpu_custom_call.1} parent=1 // loop_exit
      _
    %2296 = vsyncpa [#allocation4], 1
    %s2297 = scalar_lea.sflag [#allocation4], 1
    %2298 = vsyncpa %s2297, 1
    %2299 = vsyncpa [#allocation5], 1
    %s2300 = scalar_lea.sflag [#allocation5], 1
    %2301 = vsyncpa %s2300, 1

</llo_original>
